<compile_context>
chip_gen: v7x
topology: tpu7x:2x2x1
jax: 0.10.0
libtpu: 0.0.40
codegen_flags: <defaults>
</compile_context>

<pallas_src>
import jax
import jax.numpy as jnp
from jax import lax
from jax.experimental import pallas as pl
from jax.experimental.pallas import tpu as pltpu
import numpy as np


# -------------------- Pallas kernels --------------------

def gru_kernel(x_ref, w_i_ref, w_h_ref, b_i_ref, b_hn_ref, out_ref, xp_ref):
    """Single-layer GRU, time-major.  x_ref: (T, B, E), out_ref: (T, B, H).

    Gate weights are pre-fused: w_i = [w_ir | w_iz | w_in] (E, 3H),
    w_h = [w_hr | w_hz | w_hn] (H, 3H).  b_i = [b_r | b_z | b_in] (1, 3H) is
    folded into the hoisted input projection; only b_hn stays in the loop.
    h0 = 0 (matches nn.GRU default).
    """
    T, B, E = x_ref.shape
    G = w_h_ref.shape[1]
    H = G // 3

    # Hoisted input projection: one big (T*B, E) @ (E, 3H) MXU matmul.
    # B is padded to a multiple of 8, so this reshape is tile-aligned (free).
    x_all = x_ref[...].reshape(T * B, E)
    xp = jnp.dot(x_all, w_i_ref[...],
                 preferred_element_type=jnp.float32) + b_i_ref[...]
    xp_ref[...] = xp.reshape(T, B, G)

    def step(t, h):
        xt = xp_ref[t]                                            # (B, 3H)
        hp = jnp.dot(h, w_h_ref[...],
                     preferred_element_type=jnp.float32)          # (B, 3H)
        r = jax.nn.sigmoid(xt[:, :H] + hp[:, :H])
        z = jax.nn.sigmoid(xt[:, H:2 * H] + hp[:, H:2 * H])
        n = jnp.tanh(xt[:, 2 * H:] + r * (hp[:, 2 * H:] + b_hn_ref[...]))
        h_new = (1.0 - z) * n + z * h
        out_ref[t] = h_new
        return h_new

    lax.fori_loop(0, T, step, jnp.zeros((B, H), jnp.float32), unroll=True)


def attn_kernel(all_ref, last_ref, mask_ref,
                u_ref, w_ref, vw_ref, vb_ref, ctx_ref):
    """Additive attention over all_memory; writes ctx = [context, last] (B, 2H)."""
    B, T, H = all_ref.shape
    all_m = all_ref[...]                                          # (B, T, H)
    last = last_ref[...]                                          # (B, H)

    # U_repeat(all_memory): T is padded to a multiple of 8 so this reshape is a
    # tile-aligned reinterpretation (no VMEM relayout copy).
    am = jnp.dot(all_m.reshape(B * T, H), u_ref[...],
                 preferred_element_type=jnp.float32).reshape(B, T, H)
    lm = jnp.dot(last, w_ref[...], preferred_element_type=jnp.float32)
    er = jnp.tanh(am + lm[:, None, :])                            # (B, T, H)

    # V_repeat(er).squeeze(-1) + mask + softmax over T
    scores = jnp.sum(er * vw_ref[...][None, :, :], axis=-1) + vb_ref[...]
    scores = jnp.where(mask_ref[...] > 0.5, -1e9, scores)         # (B, T)
    smax = jnp.max(scores, axis=1, keepdims=True)
    e = jnp.exp(scores - smax)
    alpha = e * pl.reciprocal(jnp.sum(e, axis=1, keepdims=True), approx=True)

    ctx = jnp.sum(all_m * alpha[:, :, None], axis=1)              # (B, H)
    ctx_ref[:, :H] = ctx
    ctx_ref[:, H:] = last


def proj_kernel(ctx_ref, rw_ref, rb_ref, out_ref):
    """Output projection tile: sigmoid(ctx @ rw[:, j-tile] + rb[j-tile])."""
    out_ref[...] = jax.nn.sigmoid(
        jnp.dot(ctx_ref[...], rw_ref[...], preferred_element_type=jnp.float32)
        + rb_ref[...])


# -------------------- wrappers --------------------

def _round_up(x, m):
    return ((x + m - 1) // m) * m


def _vmem_specs(n):
    return [pl.BlockSpec(memory_space=pltpu.MemorySpace.VMEM) for _ in range(n)]


def gru_pallas(x_tbe, w_i, w_h, b_i, b_hn):
    T, B, _ = x_tbe.shape
    G = w_h.shape[1]
    H = G // 3
    return pl.pallas_call(
        gru_kernel,
        out_shape=jax.ShapeDtypeStruct((T, B, H), jnp.float32),
        in_specs=_vmem_specs(5),
        out_specs=pl.BlockSpec(memory_space=pltpu.MemorySpace.VMEM),
        scratch_shapes=[pltpu.VMEM((T, B, G), jnp.float32)],
    )(x_tbe, w_i, w_h, b_i, b_hn)


def attn_pallas(all_memory, last_memory, mask_f, kp):
    B, _, H = all_memory.shape
    args = (all_memory, last_memory, mask_f,
            kp["u"], kp["w"], kp["vw"], kp["vb"])
    return pl.pallas_call(
        attn_kernel,
        out_shape=jax.ShapeDtypeStruct((B, 2 * H), jnp.float32),
        in_specs=_vmem_specs(len(args)),
        out_specs=pl.BlockSpec(memory_space=pltpu.MemorySpace.VMEM),
    )(*args)


def proj_pallas(ctx, rw, rb, tn):
    B, K = ctx.shape
    Np = rw.shape[1]
    grid = (Np // tn,)
    return pl.pallas_call(
        proj_kernel,
        out_shape=jax.ShapeDtypeStruct((B, Np), jnp.float32),
        grid=grid,
        in_specs=[pl.BlockSpec((B, K), lambda j: (0, 0)),
                  pl.BlockSpec((K, tn), lambda j: (0, j)),
                  pl.BlockSpec((1, tn), lambda j: (0, j))],
        out_specs=pl.BlockSpec((B, tn), lambda j: (0, j)),
        compiler_params=pltpu.CompilerParams(
            dimension_semantics=("parallel",)),
    )(ctx, rw, rb)


def _pad2(x, r, c):
    return jnp.pad(x, ((0, r - x.shape[0]), (0, c - x.shape[1])))


def _prepare_kernel_params(params, Ep, Hp, Np):
    """Fuse GRU gates / decoder projection and zero-pad to lane-dense shapes."""
    g = params["gru"]
    d = params["decoder"]
    w_i = jnp.concatenate([_pad2(g["w_ir"], Ep, Hp),
                           _pad2(g["w_iz"], Ep, Hp),
                           _pad2(g["w_in"], Ep, Hp)], axis=1)      # (Ep, 3Hp)
    w_h = jnp.concatenate([_pad2(g["w_hr"], Hp, Hp),
                           _pad2(g["w_hz"], Hp, Hp),
                           _pad2(g["w_hn"], Hp, Hp)], axis=1)      # (Hp, 3Hp)
    b_i = jnp.concatenate([_pad2(g["b_r"], 1, Hp),
                           _pad2(g["b_z"], 1, Hp),
                           _pad2(g["b_in"], 1, Hp)], axis=1)       # (1, 3Hp)
    rw = jnp.concatenate([_pad2(d["rw1"], Hp, Np),
                          _pad2(d["rw2"], Hp, Np)], axis=0)        # (2Hp, Np)
    return {
        "w_i": w_i, "w_h": w_h, "b_i": b_i, "b_hn": _pad2(g["b_hn"], 1, Hp),
        "u": _pad2(d["u"], Hp, Hp), "w": _pad2(d["w"], Hp, Hp),
        "vw": _pad2(d["vw"], 1, Hp), "vb": d["vb"],
        "rw": rw, "rb": _pad2(d["rb"], 1, Np),
    }


def nbrnet_forward(params, basket_items, basket_item_mask, basket_seq_len):
    # --- Basket_Embedding (type='mean'); ragged lookup is plain-JAX glue ---
    item_emb = params["item_embedding"]                        # (n_items, E)
    emb = item_emb[basket_items] * basket_item_mask[..., None] # (B, L, M, E)
    counts = jnp.sum(basket_item_mask, axis=-1, keepdims=True) # (B, L, 1)
    seq_emb = jnp.sum(emb, axis=2) / jnp.maximum(counts, 1.0)
    seq_emb = seq_emb * (counts > 0).astype(jnp.float32)       # zeros at padded baskets

    B, L, E = seq_emb.shape
    H = params["gru"]["w_hr"].shape[0]
    N = params["decoder"]["rw1"].shape[1]

    # Lane/sublane-dense padding (mathematically exact: padded dims stay 0).
    Bp = _round_up(max(B, 8), 8)
    Lp = _round_up(L, 8)
    Ep = _round_up(E, 128)
    Hp = _round_up(H, 128)
    TN = min(512, _round_up(N, 128))                           # N-tile width
    Np = _round_up(N, TN)

    seq_emb_p = jnp.pad(seq_emb, ((0, Bp - B), (0, Lp - L), (0, Ep - E)))
    seq_len_p = jnp.pad(basket_seq_len.astype(jnp.int32), (0, Bp - B),
                        constant_values=1)

    kp = _prepare_kernel_params(params, Ep, Hp, Np)

    # --- GRU (Pallas kernel, time-major) ---
    x_tbe = jnp.transpose(seq_emb_p, (1, 0, 2))                # (Lp, Bp, Ep)
    all_mem_t = gru_pallas(x_tbe, kp["w_i"], kp["w_h"], kp["b_i"], kp["b_hn"])
    all_memory = jnp.transpose(all_mem_t, (1, 0, 2))           # (Bp, Lp, Hp)

    # --- gather_indexes(all_memory, seq_len - 1) ---
    idx = jnp.broadcast_to((seq_len_p - 1)[:, None, None], (Bp, 1, Hp))
    last_memory = jnp.take_along_axis(all_memory, idx, axis=1)[:, 0, :]

    # --- get_timeline_mask: True where a basket embedding is all-zero ---
    timeline_mask = jnp.all(seq_emb_p == 0.0, axis=-1).astype(jnp.float32)  # (Bp, Lp)

    # --- Decoder: attention context kernel + N-tiled output projection ---
    ctx = attn_pallas(all_memory, last_memory, timeline_mask, kp)  # (Bp, 2Hp)
    out = proj_pallas(ctx, kp["rw"], kp["rb"], TN)                 # (Bp, Np)
    return out[:B, :N]


# -------------------- deterministic parameter init --------------------

def xavier_normal(key, shape, fan_in, fan_out):
    std = (2.0 / (fan_in + fan_out)) ** 0.5
    return std * jax.random.normal(key, shape, dtype=jnp.float32)


def init_params(key, n_items, emb_size, hidden_size):
    E, H, N = emb_size, hidden_size, n_items
    ks = jax.random.split(key, 16)
    k_gru = 1.0 / (H ** 0.5)
    uni = lambda k, shape: jax.random.uniform(k, shape, jnp.float32, -k_gru, k_gru)
    return {
        "item_embedding": xavier_normal(ks[0], (N, E), N, E),
        "gru": {
            "w_ir": uni(ks[1], (E, H)), "w_iz": uni(ks[2], (E, H)), "w_in": uni(ks[3], (E, H)),
            "w_hr": uni(ks[4], (H, H)), "w_hz": uni(ks[5], (H, H)), "w_hn": uni(ks[6], (H, H)),
            "b_r": uni(ks[7], (1, H)), "b_z": uni(ks[8], (1, H)),
            "b_in": uni(ks[9], (1, H)), "b_hn": uni(ks[10], (1, H)),
        },
        "decoder": {
            "u": xavier_normal(ks[11], (H, H), H, H),        # U_repeat.weight^T
            "w": xavier_normal(ks[12], (H, H), H, H),        # W_repeat.weight^T
            "vw": xavier_normal(ks[13], (1, H), H, 1),       # V_repeat.weight
            "vb": jnp.zeros((1, 1), jnp.float32),            # V_repeat.bias
            "rw1": xavier_normal(ks[14], (H, N), 2 * H, N),  # Repeat.weight[:, :H]^T
            "rw2": xavier_normal(ks[15], (H, N), 2 * H, N),  # Repeat.weight[:, H:]^T
            "rb": jnp.zeros((1, N), jnp.float32),            # Repeat.bias
        },
    }


# -------------------- plain-JAX reference (for verification) --------------------

def nbrnet_reference(params, basket_items, basket_item_mask, basket_seq_len):
    hp = jax.lax.Precision.HIGHEST
    d = lambda a, b: jnp.dot(a, b, precision=hp)
    item_emb = params["item_embedding"]
    emb = item_emb[basket_items] * basket_item_mask[..., None]
    counts = jnp.sum(basket_item_mask, axis=-1, keepdims=True)
    seq_emb = jnp.sum(emb, axis=2) / jnp.maximum(counts, 1.0)
    seq_emb = seq_emb * (counts > 0).astype(jnp.float32)

    g = params["gru"]
    B = seq_emb.shape[0]
    H = g["w_hr"].shape[0]

    def step(h, x):
        r = jax.nn.sigmoid(d(x, g["w_ir"]) + d(h, g["w_hr"]) + g["b_r"])
        z = jax.nn.sigmoid(d(x, g["w_iz"]) + d(h, g["w_hz"]) + g["b_z"])
        n = jnp.tanh(d(x, g["w_in"]) + g["b_in"] + r * (d(h, g["w_hn"]) + g["b_hn"]))
        h_new = (1.0 - z) * n + z * h
        return h_new, h_new

    _, all_mem = lax.scan(step, jnp.zeros((B, H), jnp.float32),
                          jnp.transpose(seq_emb, (1, 0, 2)))
    all_memory = jnp.transpose(all_mem, (1, 0, 2))
    idx = jnp.broadcast_to((basket_seq_len - 1)[:, None, None], (B, 1, H))
    last = jnp.take_along_axis(all_memory, idx, axis=1)[:, 0, :]
    mask = jnp.all(seq_emb == 0.0, axis=-1)

    dc = params["decoder"]
    am = jnp.einsum("bth,hk->btk", all_memory, dc["u"], precision=hp)
    lm = d(last, dc["w"])
    er = jnp.tanh(am + lm[:, None, :])
    scores = jnp.sum(er * dc["vw"][None, :, :], axis=-1) + dc["vb"]
    scores = jnp.where(mask, -1e9, scores)
    alpha = jax.nn.softmax(scores, axis=1)
    out_r = jnp.sum(all_memory * alpha[:, :, None], axis=1)
    logits = d(out_r, dc["rw1"]) + d(last, dc["rw2"]) + dc["rb"]
    return jax.nn.sigmoid(logits)


# -------------------- main --------------------

if __name__ == "__main__":
    B, max_len, max_basket = 2, 8, 5
    emb_size = hidden_size = 32
    n_items = 128

    key = jax.random.PRNGKey(0)
    k_par, k_items, k_cnt = jax.random.split(key, 3)
    params = init_params(k_par, n_items, emb_size, hidden_size)

    # Dense representation of the ragged basket sequences.
    basket_items = jax.random.randint(k_items, (B, max_len, max_basket), 0, n_items)
    items_per_basket = jax.random.randint(k_cnt, (B, max_len), 1, max_basket + 1)
    basket_seq_len = jnp.array([5, 8], dtype=jnp.int32)        # real baskets per user

    item_slots = jnp.arange(max_basket)[None, None, :]
    basket_slots = jnp.arange(max_len)[None, :]
    basket_valid = basket_slots < basket_seq_len[:, None]                     # (B, L)
    item_valid = (item_slots < items_per_basket[..., None]) & basket_valid[..., None]
    basket_item_mask = item_valid.astype(jnp.float32)

    pred = nbrnet_forward(params, basket_items, basket_item_mask, basket_seq_len)
    pred = jax.block_until_ready(pred)

    ref = nbrnet_reference(params, basket_items, basket_item_mask, basket_seq_len)
    assert pred.shape == (B, n_items)
    assert bool(jnp.all(jnp.isfinite(pred)))
    np.testing.assert_allclose(np.asarray(pred), np.asarray(ref), rtol=5e-3, atol=5e-3)

    print("KERNEL_OK")
</pallas_src>

<mosaic_0001>
module attributes {stable_mosaic.version = 11 : i64} {
  func.func @gru_kernel(%arg0: memref<8x8x128xf32, #tpu.memory_space<vmem>>, %arg1: memref<128x384xf32, #tpu.memory_space<vmem>>, %arg2: memref<128x384xf32, #tpu.memory_space<vmem>>, %arg3: memref<1x384xf32, #tpu.memory_space<vmem>>, %arg4: memref<1x128xf32, #tpu.memory_space<vmem>>, %arg5: memref<8x8x128xf32, #tpu.memory_space<vmem>>, %arg6: memref<8x8x384xf32, #tpu.memory_space<vmem>>) attributes {dimension_semantics = [], scalar_prefetch = 0 : i64, scratch_operands = 1 : i64, tpu.core_type = #tpu.core_type<tc>} {
    %c0 = arith.constant 0 : index
    %c0_0 = arith.constant 0 : index
    %c0_1 = arith.constant 0 : index
    %0 = vector.load %arg0[%c0, %c0_0, %c0_1] : memref<8x8x128xf32, #tpu.memory_space<vmem>>, vector<8x8x128xf32>
    %1 = vector.shape_cast %0 : vector<8x8x128xf32> to vector<64x128xf32>
    %c0_2 = arith.constant 0 : index
    %c0_3 = arith.constant 0 : index
    %2 = vector.load %arg1[%c0_2, %c0_3] : memref<128x384xf32, #tpu.memory_space<vmem>>, vector<128x384xf32>
    %cst = arith.constant dense<0.000000e+00> : vector<64x384xf32>
    %3 = tpu.matmul %1, %2, %cst {dimension_numbers = #tpu.dot_dimension_numbers<[1], [0], [0], [1], [0, 0, 1, 1], [], []>} : vector<64x128xf32>, vector<128x384xf32>, vector<64x384xf32> -> vector<64x384xf32>
    %c0_4 = arith.constant 0 : index
    %c0_5 = arith.constant 0 : index
    %4 = vector.load %arg3[%c0_4, %c0_5] : memref<1x384xf32, #tpu.memory_space<vmem>>, vector<1x384xf32>
    %5 = vector.broadcast %4 : vector<1x384xf32> to vector<64x384xf32>
    %6 = arith.addf %3, %5 : vector<64x384xf32>
    %7 = vector.shape_cast %6 : vector<64x384xf32> to vector<8x8x384xf32>
    %c0_6 = arith.constant 0 : index
    %c0_7 = arith.constant 0 : index
    %c0_8 = arith.constant 0 : index
    %8 = vector.load %arg6[%c0_6, %c0_7, %c0_8] : memref<8x8x384xf32, #tpu.memory_space<vmem>>, vector<8x8x384xf32>
    tpu.vector_store %arg6[%c0_6, %c0_7, %c0_8], %7 {strides = array<i32>} : memref<8x8x384xf32, #tpu.memory_space<vmem>>, vector<8x8x384xf32>,
    %cst_9 = arith.constant 0.000000e+00 : f32
    %9 = vector.broadcast %cst_9 : f32 to vector<8x128xf32>
    %c0_i32 = arith.constant 0 : i32
    %10 = arith.index_cast %c0_i32 : i32 to index
    %c0_10 = arith.constant 0 : index
    %c0_11 = arith.constant 0 : index
    %11 = vector.load %arg6[%10, %c0_10, %c0_11] : memref<8x8x384xf32, #tpu.memory_space<vmem>>, vector<1x8x384xf32>
    %12 = vector.shape_cast %11 : vector<1x8x384xf32> to vector<8x384xf32>
    %c0_12 = arith.constant 0 : index
    %c0_13 = arith.constant 0 : index
    %13 = vector.load %arg2[%c0_12, %c0_13] : memref<128x384xf32, #tpu.memory_space<vmem>>, vector<128x384xf32>
    %cst_14 = arith.constant dense<0.000000e+00> : vector<8x384xf32>
    %14 = tpu.matmul %9, %13, %cst_14 {dimension_numbers = #tpu.dot_dimension_numbers<[1], [0], [0], [1], [0, 0, 1, 1], [], []>} : vector<8x128xf32>, vector<128x384xf32>, vector<8x384xf32> -> vector<8x384xf32>
    %15 = vector.extract_strided_slice %12 {offsets = [0, 0], sizes = [8, 128], strides = [1, 1]} : vector<8x384xf32> to vector<8x128xf32>
    %16 = vector.extract_strided_slice %14 {offsets = [0, 0], sizes = [8, 128], strides = [1, 1]} : vector<8x384xf32> to vector<8x128xf32>
    %17 = arith.addf %15, %16 : vector<8x128xf32>
    %18 = arith.negf %17 : vector<8x128xf32>
    %19 = math.exp %18 : vector<8x128xf32>
    %cst_15 = arith.constant 1.000000e+00 : f32
    %20 = vector.broadcast %cst_15 : f32 to vector<8x128xf32>
    %21 = arith.addf %20, %19 : vector<8x128xf32>
    %22 = arith.divf %20, %21 : vector<8x128xf32>
    %23 = vector.extract_strided_slice %12 {offsets = [0, 128], sizes = [8, 128], strides = [1, 1]} : vector<8x384xf32> to vector<8x128xf32>
    %24 = vector.extract_strided_slice %14 {offsets = [0, 128], sizes = [8, 128], strides = [1, 1]} : vector<8x384xf32> to vector<8x128xf32>
    %25 = arith.addf %23, %24 : vector<8x128xf32>
    %26 = arith.negf %25 : vector<8x128xf32>
    %27 = math.exp %26 : vector<8x128xf32>
    %cst_16 = arith.constant 1.000000e+00 : f32
    %28 = vector.broadcast %cst_16 : f32 to vector<8x128xf32>
    %29 = arith.addf %28, %27 : vector<8x128xf32>
    %30 = arith.divf %28, %29 : vector<8x128xf32>
    %31 = vector.extract_strided_slice %12 {offsets = [0, 256], sizes = [8, 128], strides = [1, 1]} : vector<8x384xf32> to vector<8x128xf32>
    %32 = vector.extract_strided_slice %14 {offsets = [0, 256], sizes = [8, 128], strides = [1, 1]} : vector<8x384xf32> to vector<8x128xf32>
    %c0_17 = arith.constant 0 : index
    %c0_18 = arith.constant 0 : index
    %33 = vector.load %arg4[%c0_17, %c0_18] : memref<1x128xf32, #tpu.memory_space<vmem>>, vector<1x128xf32>
    %34 = vector.broadcast %33 : vector<1x128xf32> to vector<8x128xf32>
    %35 = arith.addf %32, %34 : vector<8x128xf32>
    %36 = arith.mulf %22, %35 : vector<8x128xf32>
    %37 = arith.addf %31, %36 : vector<8x128xf32>
    %38 = math.tanh %37 : vector<8x128xf32>
    %cst_19 = arith.constant 1.000000e+00 : f32
    %39 = vector.broadcast %cst_19 : f32 to vector<8x128xf32>
    %40 = arith.subf %39, %30 : vector<8x128xf32>
    %41 = arith.mulf %40, %38 : vector<8x128xf32>
    %42 = arith.mulf %30, %9 : vector<8x128xf32>
    %43 = arith.addf %41, %42 : vector<8x128xf32>
    %44 = arith.index_cast %c0_i32 : i32 to index
    %c0_20 = arith.constant 0 : index
    %c0_21 = arith.constant 0 : index
    %45 = vector.load %arg5[%44, %c0_20, %c0_21] : memref<8x8x128xf32, #tpu.memory_space<vmem>>, vector<1x8x128xf32>
    %46 = vector.shape_cast %45 : vector<1x8x128xf32> to vector<8x128xf32>
    %47 = vector.shape_cast %43 : vector<8x128xf32> to vector<1x8x128xf32>
    tpu.vector_store %arg5[%44, %c0_20, %c0_21], %47 {strides = array<i32>} : memref<8x8x128xf32, #tpu.memory_space<vmem>>, vector<1x8x128xf32>,
    %c1_i32 = arith.constant 1 : i32
    %48 = arith.index_cast %c1_i32 : i32 to index
    %c0_22 = arith.constant 0 : index
    %c0_23 = arith.constant 0 : index
    %49 = vector.load %arg6[%48, %c0_22, %c0_23] : memref<8x8x384xf32, #tpu.memory_space<vmem>>, vector<1x8x384xf32>
    %50 = vector.shape_cast %49 : vector<1x8x384xf32> to vector<8x384xf32>
    %c0_24 = arith.constant 0 : index
    %c0_25 = arith.constant 0 : index
    %51 = vector.load %arg2[%c0_24, %c0_25] : memref<128x384xf32, #tpu.memory_space<vmem>>, vector<128x384xf32>
    %cst_26 = arith.constant dense<0.000000e+00> : vector<8x384xf32>
    %52 = tpu.matmul %43, %51, %cst_26 {dimension_numbers = #tpu.dot_dimension_numbers<[1], [0], [0], [1], [0, 0, 1, 1], [], []>} : vector<8x128xf32>, vector<128x384xf32>, vector<8x384xf32> -> vector<8x384xf32>
    %53 = vector.extract_strided_slice %50 {offsets = [0, 0], sizes = [8, 128], strides = [1, 1]} : vector<8x384xf32> to vector<8x128xf32>
    %54 = vector.extract_strided_slice %52 {offsets = [0, 0], sizes = [8, 128], strides = [1, 1]} : vector<8x384xf32> to vector<8x128xf32>
    %55 = arith.addf %53, %54 : vector<8x128xf32>
    %56 = arith.negf %55 : vector<8x128xf32>
    %57 = math.exp %56 : vector<8x128xf32>
    %cst_27 = arith.constant 1.000000e+00 : f32
    %58 = vector.broadcast %cst_27 : f32 to vector<8x128xf32>
    %59 = arith.addf %58, %57 : vector<8x128xf32>
    %60 = arith.divf %58, %59 : vector<8x128xf32>
    %61 = vector.extract_strided_slice %50 {offsets = [0, 128], sizes = [8, 128], strides = [1, 1]} : vector<8x384xf32> to vector<8x128xf32>
    %62 = vector.extract_strided_slice %52 {offsets = [0, 128], sizes = [8, 128], strides = [1, 1]} : vector<8x384xf32> to vector<8x128xf32>
    %63 = arith.addf %61, %62 : vector<8x128xf32>
    %64 = arith.negf %63 : vector<8x128xf32>
    %65 = math.exp %64 : vector<8x128xf32>
    %cst_28 = arith.constant 1.000000e+00 : f32
    %66 = vector.broadcast %cst_28 : f32 to vector<8x128xf32>
    %67 = arith.addf %66, %65 : vector<8x128xf32>
    %68 = arith.divf %66, %67 : vector<8x128xf32>
    %69 = vector.extract_strided_slice %50 {offsets = [0, 256], sizes = [8, 128], strides = [1, 1]} : vector<8x384xf32> to vector<8x128xf32>
    %70 = vector.extract_strided_slice %52 {offsets = [0, 256], sizes = [8, 128], strides = [1, 1]} : vector<8x384xf32> to vector<8x128xf32>
    %c0_29 = arith.constant 0 : index
    %c0_30 = arith.constant 0 : index
    %71 = vector.load %arg4[%c0_29, %c0_30] : memref<1x128xf32, #tpu.memory_space<vmem>>, vector<1x128xf32>
    %72 = vector.broadcast %71 : vector<1x128xf32> to vector<8x128xf32>
    %73 = arith.addf %70, %72 : vector<8x128xf32>
    %74 = arith.mulf %60, %73 : vector<8x128xf32>
    %75 = arith.addf %69, %74 : vector<8x128xf32>
    %76 = math.tanh %75 : vector<8x128xf32>
    %cst_31 = arith.constant 1.000000e+00 : f32
    %77 = vector.broadcast %cst_31 : f32 to vector<8x128xf32>
    %78 = arith.subf %77, %68 : vector<8x128xf32>
    %79 = arith.mulf %78, %76 : vector<8x128xf32>
    %80 = arith.mulf %68, %43 : vector<8x128xf32>
    %81 = arith.addf %79, %80 : vector<8x128xf32>
    %82 = arith.index_cast %c1_i32 : i32 to index
    %c0_32 = arith.constant 0 : index
    %c0_33 = arith.constant 0 : index
    %83 = vector.load %arg5[%82, %c0_32, %c0_33] : memref<8x8x128xf32, #tpu.memory_space<vmem>>, vector<1x8x128xf32>
    %84 = vector.shape_cast %83 : vector<1x8x128xf32> to vector<8x128xf32>
    %85 = vector.shape_cast %81 : vector<8x128xf32> to vector<1x8x128xf32>
    tpu.vector_store %arg5[%82, %c0_32, %c0_33], %85 {strides = array<i32>} : memref<8x8x128xf32, #tpu.memory_space<vmem>>, vector<1x8x128xf32>,
    %c2_i32 = arith.constant 2 : i32
    %86 = arith.index_cast %c2_i32 : i32 to index
    %c0_34 = arith.constant 0 : index
    %c0_35 = arith.constant 0 : index
    %87 = vector.load %arg6[%86, %c0_34, %c0_35] : memref<8x8x384xf32, #tpu.memory_space<vmem>>, vector<1x8x384xf32>
    %88 = vector.shape_cast %87 : vector<1x8x384xf32> to vector<8x384xf32>
    %c0_36 = arith.constant 0 : index
    %c0_37 = arith.constant 0 : index
    %89 = vector.load %arg2[%c0_36, %c0_37] : memref<128x384xf32, #tpu.memory_space<vmem>>, vector<128x384xf32>
    %cst_38 = arith.constant dense<0.000000e+00> : vector<8x384xf32>
    %90 = tpu.matmul %81, %89, %cst_38 {dimension_numbers = #tpu.dot_dimension_numbers<[1], [0], [0], [1], [0, 0, 1, 1], [], []>} : vector<8x128xf32>, vector<128x384xf32>, vector<8x384xf32> -> vector<8x384xf32>
    %91 = vector.extract_strided_slice %88 {offsets = [0, 0], sizes = [8, 128], strides = [1, 1]} : vector<8x384xf32> to vector<8x128xf32>
    %92 = vector.extract_strided_slice %90 {offsets = [0, 0], sizes = [8, 128], strides = [1, 1]} : vector<8x384xf32> to vector<8x128xf32>
    %93 = arith.addf %91, %92 : vector<8x128xf32>
    %94 = arith.negf %93 : vector<8x128xf32>
    %95 = math.exp %94 : vector<8x128xf32>
    %cst_39 = arith.constant 1.000000e+00 : f32
    %96 = vector.broadcast %cst_39 : f32 to vector<8x128xf32>
    %97 = arith.addf %96, %95 : vector<8x128xf32>
    %98 = arith.divf %96, %97 : vector<8x128xf32>
    %99 = vector.extract_strided_slice %88 {offsets = [0, 128], sizes = [8, 128], strides = [1, 1]} : vector<8x384xf32> to vector<8x128xf32>
    %100 = vector.extract_strided_slice %90 {offsets = [0, 128], sizes = [8, 128], strides = [1, 1]} : vector<8x384xf32> to vector<8x128xf32>
    %101 = arith.addf %99, %100 : vector<8x128xf32>
    %102 = arith.negf %101 : vector<8x128xf32>
    %103 = math.exp %102 : vector<8x128xf32>
    %cst_40 = arith.constant 1.000000e+00 : f32
    %104 = vector.broadcast %cst_40 : f32 to vector<8x128xf32>
    %105 = arith.addf %104, %103 : vector<8x128xf32>
    %106 = arith.divf %104, %105 : vector<8x128xf32>
    %107 = vector.extract_strided_slice %88 {offsets = [0, 256], sizes = [8, 128], strides = [1, 1]} : vector<8x384xf32> to vector<8x128xf32>
    %108 = vector.extract_strided_slice %90 {offsets = [0, 256], sizes = [8, 128], strides = [1, 1]} : vector<8x384xf32> to vector<8x128xf32>
    %c0_41 = arith.constant 0 : index
    %c0_42 = arith.constant 0 : index
    %109 = vector.load %arg4[%c0_41, %c0_42] : memref<1x128xf32, #tpu.memory_space<vmem>>, vector<1x128xf32>
    %110 = vector.broadcast %109 : vector<1x128xf32> to vector<8x128xf32>
    %111 = arith.addf %108, %110 : vector<8x128xf32>
    %112 = arith.mulf %98, %111 : vector<8x128xf32>
    %113 = arith.addf %107, %112 : vector<8x128xf32>
    %114 = math.tanh %113 : vector<8x128xf32>
    %cst_43 = arith.constant 1.000000e+00 : f32
    %115 = vector.broadcast %cst_43 : f32 to vector<8x128xf32>
    %116 = arith.subf %115, %106 : vector<8x128xf32>
    %117 = arith.mulf %116, %114 : vector<8x128xf32>
    %118 = arith.mulf %106, %81 : vector<8x128xf32>
    %119 = arith.addf %117, %118 : vector<8x128xf32>
    %120 = arith.index_cast %c2_i32 : i32 to index
    %c0_44 = arith.constant 0 : index
    %c0_45 = arith.constant 0 : index
    %121 = vector.load %arg5[%120, %c0_44, %c0_45] : memref<8x8x128xf32, #tpu.memory_space<vmem>>, vector<1x8x128xf32>
    %122 = vector.shape_cast %121 : vector<1x8x128xf32> to vector<8x128xf32>
    %123 = vector.shape_cast %119 : vector<8x128xf32> to vector<1x8x128xf32>
    tpu.vector_store %arg5[%120, %c0_44, %c0_45], %123 {strides = array<i32>} : memref<8x8x128xf32, #tpu.memory_space<vmem>>, vector<1x8x128xf32>,
    %c3_i32 = arith.constant 3 : i32
    %124 = arith.index_cast %c3_i32 : i32 to index
    %c0_46 = arith.constant 0 : index
    %c0_47 = arith.constant 0 : index
    %125 = vector.load %arg6[%124, %c0_46, %c0_47] : memref<8x8x384xf32, #tpu.memory_space<vmem>>, vector<1x8x384xf32>
    %126 = vector.shape_cast %125 : vector<1x8x384xf32> to vector<8x384xf32>
    %c0_48 = arith.constant 0 : index
    %c0_49 = arith.constant 0 : index
    %127 = vector.load %arg2[%c0_48, %c0_49] : memref<128x384xf32, #tpu.memory_space<vmem>>, vector<128x384xf32>
    %cst_50 = arith.constant dense<0.000000e+00> : vector<8x384xf32>
    %128 = tpu.matmul %119, %127, %cst_50 {dimension_numbers = #tpu.dot_dimension_numbers<[1], [0], [0], [1], [0, 0, 1, 1], [], []>} : vector<8x128xf32>, vector<128x384xf32>, vector<8x384xf32> -> vector<8x384xf32>
    %129 = vector.extract_strided_slice %126 {offsets = [0, 0], sizes = [8, 128], strides = [1, 1]} : vector<8x384xf32> to vector<8x128xf32>
    %130 = vector.extract_strided_slice %128 {offsets = [0, 0], sizes = [8, 128], strides = [1, 1]} : vector<8x384xf32> to vector<8x128xf32>
    %131 = arith.addf %129, %130 : vector<8x128xf32>
    %132 = arith.negf %131 : vector<8x128xf32>
    %133 = math.exp %132 : vector<8x128xf32>
    %cst_51 = arith.constant 1.000000e+00 : f32
    %134 = vector.broadcast %cst_51 : f32 to vector<8x128xf32>
    %135 = arith.addf %134, %133 : vector<8x128xf32>
    %136 = arith.divf %134, %135 : vector<8x128xf32>
    %137 = vector.extract_strided_slice %126 {offsets = [0, 128], sizes = [8, 128], strides = [1, 1]} : vector<8x384xf32> to vector<8x128xf32>
    %138 = vector.extract_strided_slice %128 {offsets = [0, 128], sizes = [8, 128], strides = [1, 1]} : vector<8x384xf32> to vector<8x128xf32>
    %139 = arith.addf %137, %138 : vector<8x128xf32>
    %140 = arith.negf %139 : vector<8x128xf32>
    %141 = math.exp %140 : vector<8x128xf32>
    %cst_52 = arith.constant 1.000000e+00 : f32
    %142 = vector.broadcast %cst_52 : f32 to vector<8x128xf32>
    %143 = arith.addf %142, %141 : vector<8x128xf32>
    %144 = arith.divf %142, %143 : vector<8x128xf32>
    %145 = vector.extract_strided_slice %126 {offsets = [0, 256], sizes = [8, 128], strides = [1, 1]} : vector<8x384xf32> to vector<8x128xf32>
    %146 = vector.extract_strided_slice %128 {offsets = [0, 256], sizes = [8, 128], strides = [1, 1]} : vector<8x384xf32> to vector<8x128xf32>
    %c0_53 = arith.constant 0 : index
    %c0_54 = arith.constant 0 : index
    %147 = vector.load %arg4[%c0_53, %c0_54] : memref<1x128xf32, #tpu.memory_space<vmem>>, vector<1x128xf32>
    %148 = vector.broadcast %147 : vector<1x128xf32> to vector<8x128xf32>
    %149 = arith.addf %146, %148 : vector<8x128xf32>
    %150 = arith.mulf %136, %149 : vector<8x128xf32>
    %151 = arith.addf %145, %150 : vector<8x128xf32>
    %152 = math.tanh %151 : vector<8x128xf32>
    %cst_55 = arith.constant 1.000000e+00 : f32
    %153 = vector.broadcast %cst_55 : f32 to vector<8x128xf32>
    %154 = arith.subf %153, %144 : vector<8x128xf32>
    %155 = arith.mulf %154, %152 : vector<8x128xf32>
    %156 = arith.mulf %144, %119 : vector<8x128xf32>
    %157 = arith.addf %155, %156 : vector<8x128xf32>
    %158 = arith.index_cast %c3_i32 : i32 to index
    %c0_56 = arith.constant 0 : index
    %c0_57 = arith.constant 0 : index
    %159 = vector.load %arg5[%158, %c0_56, %c0_57] : memref<8x8x128xf32, #tpu.memory_space<vmem>>, vector<1x8x128xf32>
    %160 = vector.shape_cast %159 : vector<1x8x128xf32> to vector<8x128xf32>
    %161 = vector.shape_cast %157 : vector<8x128xf32> to vector<1x8x128xf32>
    tpu.vector_store %arg5[%158, %c0_56, %c0_57], %161 {strides = array<i32>} : memref<8x8x128xf32, #tpu.memory_space<vmem>>, vector<1x8x128xf32>,
    %c4_i32 = arith.constant 4 : i32
    %162 = arith.index_cast %c4_i32 : i32 to index
    %c0_58 = arith.constant 0 : index
    %c0_59 = arith.constant 0 : index
    %163 = vector.load %arg6[%162, %c0_58, %c0_59] : memref<8x8x384xf32, #tpu.memory_space<vmem>>, vector<1x8x384xf32>
    %164 = vector.shape_cast %163 : vector<1x8x384xf32> to vector<8x384xf32>
    %c0_60 = arith.constant 0 : index
    %c0_61 = arith.constant 0 : index
    %165 = vector.load %arg2[%c0_60, %c0_61] : memref<128x384xf32, #tpu.memory_space<vmem>>, vector<128x384xf32>
    %cst_62 = arith.constant dense<0.000000e+00> : vector<8x384xf32>
    %166 = tpu.matmul %157, %165, %cst_62 {dimension_numbers = #tpu.dot_dimension_numbers<[1], [0], [0], [1], [0, 0, 1, 1], [], []>} : vector<8x128xf32>, vector<128x384xf32>, vector<8x384xf32> -> vector<8x384xf32>
    %167 = vector.extract_strided_slice %164 {offsets = [0, 0], sizes = [8, 128], strides = [1, 1]} : vector<8x384xf32> to vector<8x128xf32>
    %168 = vector.extract_strided_slice %166 {offsets = [0, 0], sizes = [8, 128], strides = [1, 1]} : vector<8x384xf32> to vector<8x128xf32>
    %169 = arith.addf %167, %168 : vector<8x128xf32>
    %170 = arith.negf %169 : vector<8x128xf32>
    %171 = math.exp %170 : vector<8x128xf32>
    %cst_63 = arith.constant 1.000000e+00 : f32
    %172 = vector.broadcast %cst_63 : f32 to vector<8x128xf32>
    %173 = arith.addf %172, %171 : vector<8x128xf32>
    %174 = arith.divf %172, %173 : vector<8x128xf32>
    %175 = vector.extract_strided_slice %164 {offsets = [0, 128], sizes = [8, 128], strides = [1, 1]} : vector<8x384xf32> to vector<8x128xf32>
    %176 = vector.extract_strided_slice %166 {offsets = [0, 128], sizes = [8, 128], strides = [1, 1]} : vector<8x384xf32> to vector<8x128xf32>
    %177 = arith.addf %175, %176 : vector<8x128xf32>
    %178 = arith.negf %177 : vector<8x128xf32>
    %179 = math.exp %178 : vector<8x128xf32>
    %cst_64 = arith.constant 1.000000e+00 : f32
    %180 = vector.broadcast %cst_64 : f32 to vector<8x128xf32>
    %181 = arith.addf %180, %179 : vector<8x128xf32>
    %182 = arith.divf %180, %181 : vector<8x128xf32>
    %183 = vector.extract_strided_slice %164 {offsets = [0, 256], sizes = [8, 128], strides = [1, 1]} : vector<8x384xf32> to vector<8x128xf32>
    %184 = vector.extract_strided_slice %166 {offsets = [0, 256], sizes = [8, 128], strides = [1, 1]} : vector<8x384xf32> to vector<8x128xf32>
    %c0_65 = arith.constant 0 : index
    %c0_66 = arith.constant 0 : index
    %185 = vector.load %arg4[%c0_65, %c0_66] : memref<1x128xf32, #tpu.memory_space<vmem>>, vector<1x128xf32>
    %186 = vector.broadcast %185 : vector<1x128xf32> to vector<8x128xf32>
    %187 = arith.addf %184, %186 : vector<8x128xf32>
    %188 = arith.mulf %174, %187 : vector<8x128xf32>
    %189 = arith.addf %183, %188 : vector<8x128xf32>
    %190 = math.tanh %189 : vector<8x128xf32>
    %cst_67 = arith.constant 1.000000e+00 : f32
    %191 = vector.broadcast %cst_67 : f32 to vector<8x128xf32>
    %192 = arith.subf %191, %182 : vector<8x128xf32>
    %193 = arith.mulf %192, %190 : vector<8x128xf32>
    %194 = arith.mulf %182, %157 : vector<8x128xf32>
    %195 = arith.addf %193, %194 : vector<8x128xf32>
    %196 = arith.index_cast %c4_i32 : i32 to index
    %c0_68 = arith.constant 0 : index
    %c0_69 = arith.constant 0 : index
    %197 = vector.load %arg5[%196, %c0_68, %c0_69] : memref<8x8x128xf32, #tpu.memory_space<vmem>>, vector<1x8x128xf32>
    %198 = vector.shape_cast %197 : vector<1x8x128xf32> to vector<8x128xf32>
    %199 = vector.shape_cast %195 : vector<8x128xf32> to vector<1x8x128xf32>
    tpu.vector_store %arg5[%196, %c0_68, %c0_69], %199 {strides = array<i32>} : memref<8x8x128xf32, #tpu.memory_space<vmem>>, vector<1x8x128xf32>,
    %c5_i32 = arith.constant 5 : i32
    %200 = arith.index_cast %c5_i32 : i32 to index
    %c0_70 = arith.constant 0 : index
    %c0_71 = arith.constant 0 : index
    %201 = vector.load %arg6[%200, %c0_70, %c0_71] : memref<8x8x384xf32, #tpu.memory_space<vmem>>, vector<1x8x384xf32>
    %202 = vector.shape_cast %201 : vector<1x8x384xf32> to vector<8x384xf32>
    %c0_72 = arith.constant 0 : index
    %c0_73 = arith.constant 0 : index
    %203 = vector.load %arg2[%c0_72, %c0_73] : memref<128x384xf32, #tpu.memory_space<vmem>>, vector<128x384xf32>
    %cst_74 = arith.constant dense<0.000000e+00> : vector<8x384xf32>
    %204 = tpu.matmul %195, %203, %cst_74 {dimension_numbers = #tpu.dot_dimension_numbers<[1], [0], [0], [1], [0, 0, 1, 1], [], []>} : vector<8x128xf32>, vector<128x384xf32>, vector<8x384xf32> -> vector<8x384xf32>
    %205 = vector.extract_strided_slice %202 {offsets = [0, 0], sizes = [8, 128], strides = [1, 1]} : vector<8x384xf32> to vector<8x128xf32>
    %206 = vector.extract_strided_slice %204 {offsets = [0, 0], sizes = [8, 128], strides = [1, 1]} : vector<8x384xf32> to vector<8x128xf32>
    %207 = arith.addf %205, %206 : vector<8x128xf32>
    %208 = arith.negf %207 : vector<8x128xf32>
    %209 = math.exp %208 : vector<8x128xf32>
    %cst_75 = arith.constant 1.000000e+00 : f32
    %210 = vector.broadcast %cst_75 : f32 to vector<8x128xf32>
    %211 = arith.addf %210, %209 : vector<8x128xf32>
    %212 = arith.divf %210, %211 : vector<8x128xf32>
    %213 = vector.extract_strided_slice %202 {offsets = [0, 128], sizes = [8, 128], strides = [1, 1]} : vector<8x384xf32> to vector<8x128xf32>
    %214 = vector.extract_strided_slice %204 {offsets = [0, 128], sizes = [8, 128], strides = [1, 1]} : vector<8x384xf32> to vector<8x128xf32>
    %215 = arith.addf %213, %214 : vector<8x128xf32>
    %216 = arith.negf %215 : vector<8x128xf32>
    %217 = math.exp %216 : vector<8x128xf32>
    %cst_76 = arith.constant 1.000000e+00 : f32
    %218 = vector.broadcast %cst_76 : f32 to vector<8x128xf32>
    %219 = arith.addf %218, %217 : vector<8x128xf32>
    %220 = arith.divf %218, %219 : vector<8x128xf32>
    %221 = vector.extract_strided_slice %202 {offsets = [0, 256], sizes = [8, 128], strides = [1, 1]} : vector<8x384xf32> to vector<8x128xf32>
    %222 = vector.extract_strided_slice %204 {offsets = [0, 256], sizes = [8, 128], strides = [1, 1]} : vector<8x384xf32> to vector<8x128xf32>
    %c0_77 = arith.constant 0 : index
    %c0_78 = arith.constant 0 : index
    %223 = vector.load %arg4[%c0_77, %c0_78] : memref<1x128xf32, #tpu.memory_space<vmem>>, vector<1x128xf32>
    %224 = vector.broadcast %223 : vector<1x128xf32> to vector<8x128xf32>
    %225 = arith.addf %222, %224 : vector<8x128xf32>
    %226 = arith.mulf %212, %225 : vector<8x128xf32>
    %227 = arith.addf %221, %226 : vector<8x128xf32>
    %228 = math.tanh %227 : vector<8x128xf32>
    %cst_79 = arith.constant 1.000000e+00 : f32
    %229 = vector.broadcast %cst_79 : f32 to vector<8x128xf32>
    %230 = arith.subf %229, %220 : vector<8x128xf32>
    %231 = arith.mulf %230, %228 : vector<8x128xf32>
    %232 = arith.mulf %220, %195 : vector<8x128xf32>
    %233 = arith.addf %231, %232 : vector<8x128xf32>
    %234 = arith.index_cast %c5_i32 : i32 to index
    %c0_80 = arith.constant 0 : index
    %c0_81 = arith.constant 0 : index
    %235 = vector.load %arg5[%234, %c0_80, %c0_81] : memref<8x8x128xf32, #tpu.memory_space<vmem>>, vector<1x8x128xf32>
    %236 = vector.shape_cast %235 : vector<1x8x128xf32> to vector<8x128xf32>
    %237 = vector.shape_cast %233 : vector<8x128xf32> to vector<1x8x128xf32>
    tpu.vector_store %arg5[%234, %c0_80, %c0_81], %237 {strides = array<i32>} : memref<8x8x128xf32, #tpu.memory_space<vmem>>, vector<1x8x128xf32>,
    %c6_i32 = arith.constant 6 : i32
    %238 = arith.index_cast %c6_i32 : i32 to index
    %c0_82 = arith.constant 0 : index
    %c0_83 = arith.constant 0 : index
    %239 = vector.load %arg6[%238, %c0_82, %c0_83] : memref<8x8x384xf32, #tpu.memory_space<vmem>>, vector<1x8x384xf32>
    %240 = vector.shape_cast %239 : vector<1x8x384xf32> to vector<8x384xf32>
    %c0_84 = arith.constant 0 : index
    %c0_85 = arith.constant 0 : index
    %241 = vector.load %arg2[%c0_84, %c0_85] : memref<128x384xf32, #tpu.memory_space<vmem>>, vector<128x384xf32>
    %cst_86 = arith.constant dense<0.000000e+00> : vector<8x384xf32>
    %242 = tpu.matmul %233, %241, %cst_86 {dimension_numbers = #tpu.dot_dimension_numbers<[1], [0], [0], [1], [0, 0, 1, 1], [], []>} : vector<8x128xf32>, vector<128x384xf32>, vector<8x384xf32> -> vector<8x384xf32>
    %243 = vector.extract_strided_slice %240 {offsets = [0, 0], sizes = [8, 128], strides = [1, 1]} : vector<8x384xf32> to vector<8x128xf32>
    %244 = vector.extract_strided_slice %242 {offsets = [0, 0], sizes = [8, 128], strides = [1, 1]} : vector<8x384xf32> to vector<8x128xf32>
    %245 = arith.addf %243, %244 : vector<8x128xf32>
    %246 = arith.negf %245 : vector<8x128xf32>
    %247 = math.exp %246 : vector<8x128xf32>
    %cst_87 = arith.constant 1.000000e+00 : f32
    %248 = vector.broadcast %cst_87 : f32 to vector<8x128xf32>
    %249 = arith.addf %248, %247 : vector<8x128xf32>
    %250 = arith.divf %248, %249 : vector<8x128xf32>
    %251 = vector.extract_strided_slice %240 {offsets = [0, 128], sizes = [8, 128], strides = [1, 1]} : vector<8x384xf32> to vector<8x128xf32>
    %252 = vector.extract_strided_slice %242 {offsets = [0, 128], sizes = [8, 128], strides = [1, 1]} : vector<8x384xf32> to vector<8x128xf32>
    %253 = arith.addf %251, %252 : vector<8x128xf32>
    %254 = arith.negf %253 : vector<8x128xf32>
    %255 = math.exp %254 : vector<8x128xf32>
    %cst_88 = arith.constant 1.000000e+00 : f32
    %256 = vector.broadcast %cst_88 : f32 to vector<8x128xf32>
    %257 = arith.addf %256, %255 : vector<8x128xf32>
    %258 = arith.divf %256, %257 : vector<8x128xf32>
    %259 = vector.extract_strided_slice %240 {offsets = [0, 256], sizes = [8, 128], strides = [1, 1]} : vector<8x384xf32> to vector<8x128xf32>
    %260 = vector.extract_strided_slice %242 {offsets = [0, 256], sizes = [8, 128], strides = [1, 1]} : vector<8x384xf32> to vector<8x128xf32>
    %c0_89 = arith.constant 0 : index
    %c0_90 = arith.constant 0 : index
    %261 = vector.load %arg4[%c0_89, %c0_90] : memref<1x128xf32, #tpu.memory_space<vmem>>, vector<1x128xf32>
    %262 = vector.broadcast %261 : vector<1x128xf32> to vector<8x128xf32>
    %263 = arith.addf %260, %262 : vector<8x128xf32>
    %264 = arith.mulf %250, %263 : vector<8x128xf32>
    %265 = arith.addf %259, %264 : vector<8x128xf32>
    %266 = math.tanh %265 : vector<8x128xf32>
    %cst_91 = arith.constant 1.000000e+00 : f32
    %267 = vector.broadcast %cst_91 : f32 to vector<8x128xf32>
    %268 = arith.subf %267, %258 : vector<8x128xf32>
    %269 = arith.mulf %268, %266 : vector<8x128xf32>
    %270 = arith.mulf %258, %233 : vector<8x128xf32>
    %271 = arith.addf %269, %270 : vector<8x128xf32>
    %272 = arith.index_cast %c6_i32 : i32 to index
    %c0_92 = arith.constant 0 : index
    %c0_93 = arith.constant 0 : index
    %273 = vector.load %arg5[%272, %c0_92, %c0_93] : memref<8x8x128xf32, #tpu.memory_space<vmem>>, vector<1x8x128xf32>
    %274 = vector.shape_cast %273 : vector<1x8x128xf32> to vector<8x128xf32>
    %275 = vector.shape_cast %271 : vector<8x128xf32> to vector<1x8x128xf32>
    tpu.vector_store %arg5[%272, %c0_92, %c0_93], %275 {strides = array<i32>} : memref<8x8x128xf32, #tpu.memory_space<vmem>>, vector<1x8x128xf32>,
    %c7_i32 = arith.constant 7 : i32
    %276 = arith.index_cast %c7_i32 : i32 to index
    %c0_94 = arith.constant 0 : index
    %c0_95 = arith.constant 0 : index
    %277 = vector.load %arg6[%276, %c0_94, %c0_95] : memref<8x8x384xf32, #tpu.memory_space<vmem>>, vector<1x8x384xf32>
    %278 = vector.shape_cast %277 : vector<1x8x384xf32> to vector<8x384xf32>
    %c0_96 = arith.constant 0 : index
    %c0_97 = arith.constant 0 : index
    %279 = vector.load %arg2[%c0_96, %c0_97] : memref<128x384xf32, #tpu.memory_space<vmem>>, vector<128x384xf32>
    %cst_98 = arith.constant dense<0.000000e+00> : vector<8x384xf32>
    %280 = tpu.matmul %271, %279, %cst_98 {dimension_numbers = #tpu.dot_dimension_numbers<[1], [0], [0], [1], [0, 0, 1, 1], [], []>} : vector<8x128xf32>, vector<128x384xf32>, vector<8x384xf32> -> vector<8x384xf32>
    %281 = vector.extract_strided_slice %278 {offsets = [0, 0], sizes = [8, 128], strides = [1, 1]} : vector<8x384xf32> to vector<8x128xf32>
    %282 = vector.extract_strided_slice %280 {offsets = [0, 0], sizes = [8, 128], strides = [1, 1]} : vector<8x384xf32> to vector<8x128xf32>
    %283 = arith.addf %281, %282 : vector<8x128xf32>
    %284 = arith.negf %283 : vector<8x128xf32>
    %285 = math.exp %284 : vector<8x128xf32>
    %cst_99 = arith.constant 1.000000e+00 : f32
    %286 = vector.broadcast %cst_99 : f32 to vector<8x128xf32>
    %287 = arith.addf %286, %285 : vector<8x128xf32>
    %288 = arith.divf %286, %287 : vector<8x128xf32>
    %289 = vector.extract_strided_slice %278 {offsets = [0, 128], sizes = [8, 128], strides = [1, 1]} : vector<8x384xf32> to vector<8x128xf32>
    %290 = vector.extract_strided_slice %280 {offsets = [0, 128], sizes = [8, 128], strides = [1, 1]} : vector<8x384xf32> to vector<8x128xf32>
    %291 = arith.addf %289, %290 : vector<8x128xf32>
    %292 = arith.negf %291 : vector<8x128xf32>
    %293 = math.exp %292 : vector<8x128xf32>
    %cst_100 = arith.constant 1.000000e+00 : f32
    %294 = vector.broadcast %cst_100 : f32 to vector<8x128xf32>
    %295 = arith.addf %294, %293 : vector<8x128xf32>
    %296 = arith.divf %294, %295 : vector<8x128xf32>
    %297 = vector.extract_strided_slice %278 {offsets = [0, 256], sizes = [8, 128], strides = [1, 1]} : vector<8x384xf32> to vector<8x128xf32>
    %298 = vector.extract_strided_slice %280 {offsets = [0, 256], sizes = [8, 128], strides = [1, 1]} : vector<8x384xf32> to vector<8x128xf32>
    %c0_101 = arith.constant 0 : index
    %c0_102 = arith.constant 0 : index
    %299 = vector.load %arg4[%c0_101, %c0_102] : memref<1x128xf32, #tpu.memory_space<vmem>>, vector<1x128xf32>
    %300 = vector.broadcast %299 : vector<1x128xf32> to vector<8x128xf32>
    %301 = arith.addf %298, %300 : vector<8x128xf32>
    %302 = arith.mulf %288, %301 : vector<8x128xf32>
    %303 = arith.addf %297, %302 : vector<8x128xf32>
    %304 = math.tanh %303 : vector<8x128xf32>
    %cst_103 = arith.constant 1.000000e+00 : f32
    %305 = vector.broadcast %cst_103 : f32 to vector<8x128xf32>
    %306 = arith.subf %305, %296 : vector<8x128xf32>
    %307 = arith.mulf %306, %304 : vector<8x128xf32>
    %308 = arith.mulf %296, %271 : vector<8x128xf32>
    %309 = arith.addf %307, %308 : vector<8x128xf32>
    %310 = arith.index_cast %c7_i32 : i32 to index
    %c0_104 = arith.constant 0 : index
    %c0_105 = arith.constant 0 : index
    %311 = vector.load %arg5[%310, %c0_104, %c0_105] : memref<8x8x128xf32, #tpu.memory_space<vmem>>, vector<1x8x128xf32>
    %312 = vector.shape_cast %311 : vector<1x8x128xf32> to vector<8x128xf32>
    %313 = vector.shape_cast %309 : vector<8x128xf32> to vector<1x8x128xf32>
    tpu.vector_store %arg5[%310, %c0_104, %c0_105], %313 {strides = array<i32>} : memref<8x8x128xf32, #tpu.memory_space<vmem>>, vector<1x8x128xf32>,
    %c8_i32 = arith.constant 8 : i32
    return
  }
}

</mosaic_0001>

<llo_original>
// kernel: tpu_custom_call.1
$region0: #{tpu_custom_call.1}
  #allocation0 [shape = 'u32[]', space=smem, size = 0x4, offset = 0x4, fixed_abs, tag = 'smem constant byte address 0x4 - core index']
  #allocation1 [shape = 'u32[144,128]{1,0:T(1,128)}', space=vmem, size = 0x12000, scoped, tag = 'internal scratch']
  #allocation2 [shape = 'f32[8,8,384]{2,1,0:T(8,128)}', space=vmem, size = 0x18000, scoped, tag = 'scratch operand']
  %s0 = inlined_call_operand.hbm [shape: f32[8,8,128], index: 0, kind: input, shape index: {}]
  %s1 = inlined_call_operand.hbm [shape: f32[128,384], index: 1, kind: input, shape index: {}]
  %s2 = inlined_call_operand.hbm [shape: f32[128,384], index: 2, kind: input, shape index: {}]
  %s3 = inlined_call_operand.vmem [shape: f32[1,384], index: 3, kind: input, shape index: {}]
  %s4 = inlined_call_operand.vmem [shape: f32[1,128], index: 4, kind: input, shape index: {}]
  %s5 = inlined_call_operand.hbm [shape: f32[8,8,128], index: 5, kind: output, shape index: {}]
  %s6 = sld [smem:[#allocation0]]
  $region42: #{tpu_custom_call.1} parent=0
    _
  %s8 = ssub.s32 1, %s6
  %s9 = scalar_select 0, %s8, %s6
  $region1: #{tpu_custom_call.1} parent=0
    #allocation3 [shape = 'u8[32768]{0}', space=vmem, size = 0x8000, scoped, tag = 'input window, operand 0, single buffered']
    #allocation4 [shape = 's32[1]{0}', space=sflag, size = 0x4, scoped, tag = 'scoped memory for tpu_custom_call.1']
    #allocation5 [shape = 's32[1]{0}', space=sflag, size = 0x4, scoped, tag = 'scoped memory for tpu_custom_call.1']
    #allocation6 [shape = 'u8[196608]{0}', space=vmem, size = 0x30000, scoped, tag = 'input window, operand 1, single buffered']
    #allocation7 [shape = 's32[1]{0}', space=sflag, size = 0x4, scoped, tag = 'scoped memory for tpu_custom_call.1']
    #allocation8 [shape = 'u8[196608]{0}', space=vmem, size = 0x30000, scoped, tag = 'input window, operand 2, single buffered']
    #allocation9 [shape = 'u8[32768]{0}', space=vmem, size = 0x8000, scoped, tag = 'output window, operand 0, single buffered']
    %10 = vsyncpa [#allocation4], 0
    %11 = vsyncpa [#allocation7], 0
    %12 = vsyncpa [#allocation5], 0
    // Predicated region
    $region2: #{tpu_custom_call.1} parent=1 // pred_check
      _
    $region3: #{tpu_custom_call.1} parent=1 // pred_check_branch
      %14 = sbr.rel (0) target = $region5
    $region4: #{tpu_custom_call.1} parent=1 // pred_region
      %s16 = ssub.s32 1024, 1024
      %17 = vsyncadd [#allocation4], %s16
      %s18 = sshll.u32 [#allocation3], 4
      %s19 = int_to_ptr.vmem [resolvable:$true] %s18
      %24 = dma.hbm_to_vmem [thread:$0]  %s0, 1024, %s19, [#allocation4], 128, 128, 8
    $region5: #{tpu_custom_call.1} parent=1 // pred_fallthru
      _
    // Predicated region
    $region6: #{tpu_custom_call.1} parent=1 // pred_check
      _
    $region7: #{tpu_custom_call.1} parent=1 // pred_check_branch
      %26 = sbr.rel (0) target = $region9
    $region8: #{tpu_custom_call.1} parent=1 // pred_region
      %s28 = ssub.s32 6144, 6144
      %29 = vsyncadd [#allocation7], %s28
      %s30 = sshll.u32 [#allocation6], 4
      %s31 = int_to_ptr.vmem [resolvable:$true] %s30
      %36 = dma.hbm_to_vmem [thread:$0]  %s1, 6144, %s31, [#allocation7], 384, 384, 24
    $region9: #{tpu_custom_call.1} parent=1 // pred_fallthru
      _
    // Predicated region
    $region10: #{tpu_custom_call.1} parent=1 // pred_check
      _
    $region11: #{tpu_custom_call.1} parent=1 // pred_check_branch
      %38 = sbr.rel (0) target = $region13
    $region12: #{tpu_custom_call.1} parent=1 // pred_region
      %s40 = ssub.s32 6144, 6144
      %41 = vsyncadd [#allocation7], %s40
      %s42 = sshll.u32 [#allocation8], 4
      %s43 = int_to_ptr.vmem [resolvable:$true] %s42
      %48 = dma.hbm_to_vmem [thread:$0]  %s2, 6144, %s43, [#allocation7], 384, 384, 24
    $region13: #{tpu_custom_call.1} parent=1 // pred_fallthru
      _
    // Predicated region
    $region14: #{tpu_custom_call.1} parent=1 // pred_check
      _
    $region15: #{tpu_custom_call.1} parent=1 // pred_check_branch
      %50 = sbr.rel (0) target = $region17
    $region16: #{tpu_custom_call.1} parent=1 // pred_region
      _
    $region17: #{tpu_custom_call.1} parent=1 // pred_fallthru
      _
    // Predicated region
    $region18: #{tpu_custom_call.1} parent=1 // pred_check
      _
    $region19: #{tpu_custom_call.1} parent=1 // pred_check_branch
      %52 = sbr.rel (0) target = $region21
    $region20: #{tpu_custom_call.1} parent=1 // pred_region
      _
    $region21: #{tpu_custom_call.1} parent=1 // pred_fallthru
      _
    // Predicated region
    $region22: #{tpu_custom_call.1} parent=1 // pred_check
      _
    $region23: #{tpu_custom_call.1} parent=1 // pred_check_branch
      %54 = sbr.rel (0) target = $region25
    $region24: #{tpu_custom_call.1} parent=1 // pred_region
      %55 = dma.done [#allocation4], 1024
    $region25: #{tpu_custom_call.1} parent=1 // pred_fallthru
      _
    // Predicated region
    $region26: #{tpu_custom_call.1} parent=1 // pred_check
      _
    $region27: #{tpu_custom_call.1} parent=1 // pred_check_branch
      %57 = sbr.rel (0) target = $region29
    $region28: #{tpu_custom_call.1} parent=1 // pred_region
      %58 = dma.done [#allocation7], 6144
    $region29: #{tpu_custom_call.1} parent=1 // pred_fallthru
      _
    // Predicated region
    $region30: #{tpu_custom_call.1} parent=1 // pred_check
      _
    $region31: #{tpu_custom_call.1} parent=1 // pred_check_branch
      %60 = sbr.rel (0) target = $region33
    $region32: #{tpu_custom_call.1} parent=1 // pred_region
      %61 = dma.done [#allocation7], 6144
    $region33: #{tpu_custom_call.1} parent=1 // pred_fallthru
      _
    %v62 = vld [vmem:[#allocation3] sm:$0xff]
    %v63 = vld [vmem:[#allocation3 + $0x8] sm:$0xff]
    %v64 = vld [vmem:[#allocation3 + $0x10] sm:$0xff]
    %v65 = vld [vmem:[#allocation3 + $0x18] sm:$0xff]
    %v66 = vld [vmem:[#allocation3 + $0x20] sm:$0xff]
    %v67 = vld [vmem:[#allocation3 + $0x28] sm:$0xff]
    %v68 = vld [vmem:[#allocation3 + $0x30] sm:$0xff]
    %v69 = vld [vmem:[#allocation3 + $0x38] sm:$0xff]
    %v70 = vld [vmem:[#allocation6] sm:$0xff]
    %v71 = vld [vmem:[#allocation6 + $0x8] sm:$0xff]
    %v72 = vld [vmem:[#allocation6 + $0x10] sm:$0xff]
    %v73 = vld [vmem:[#allocation6 + $0x18] sm:$0xff]
    %v74 = vld [vmem:[#allocation6 + $0x20] sm:$0xff]
    %v75 = vld [vmem:[#allocation6 + $0x28] sm:$0xff]
    %v76 = vld [vmem:[#allocation6 + $0x30] sm:$0xff]
    %v77 = vld [vmem:[#allocation6 + $0x38] sm:$0xff]
    %v78 = vld [vmem:[#allocation6 + $0x40] sm:$0xff]
    %v79 = vld [vmem:[#allocation6 + $0x48] sm:$0xff]
    %v80 = vld [vmem:[#allocation6 + $0x50] sm:$0xff]
    %v81 = vld [vmem:[#allocation6 + $0x58] sm:$0xff]
    %v82 = vld [vmem:[#allocation6 + $0x60] sm:$0xff]
    %v83 = vld [vmem:[#allocation6 + $0x68] sm:$0xff]
    %v84 = vld [vmem:[#allocation6 + $0x70] sm:$0xff]
    %v85 = vld [vmem:[#allocation6 + $0x78] sm:$0xff]
    %v86 = vld [vmem:[#allocation6 + $0x80] sm:$0xff]
    %v87 = vld [vmem:[#allocation6 + $0x88] sm:$0xff]
    %v88 = vld [vmem:[#allocation6 + $0x90] sm:$0xff]
    %v89 = vld [vmem:[#allocation6 + $0x98] sm:$0xff]
    %v90 = vld [vmem:[#allocation6 + $0xa0] sm:$0xff]
    %v91 = vld [vmem:[#allocation6 + $0xa8] sm:$0xff]
    %v92 = vld [vmem:[#allocation6 + $0xb0] sm:$0xff]
    %v93 = vld [vmem:[#allocation6 + $0xb8] sm:$0xff]
    %v94 = vld [vmem:[#allocation6 + $0xc0] sm:$0xff]
    %v95 = vld [vmem:[#allocation6 + $0xc8] sm:$0xff]
    %v96 = vld [vmem:[#allocation6 + $0xd0] sm:$0xff]
    %v97 = vld [vmem:[#allocation6 + $0xd8] sm:$0xff]
    %v98 = vld [vmem:[#allocation6 + $0xe0] sm:$0xff]
    %v99 = vld [vmem:[#allocation6 + $0xe8] sm:$0xff]
    %v100 = vld [vmem:[#allocation6 + $0xf0] sm:$0xff]
    %v101 = vld [vmem:[#allocation6 + $0xf8] sm:$0xff]
    %v102 = vld [vmem:[#allocation6 + $0x100] sm:$0xff]
    %v103 = vld [vmem:[#allocation6 + $0x108] sm:$0xff]
    %v104 = vld [vmem:[#allocation6 + $0x110] sm:$0xff]
    %v105 = vld [vmem:[#allocation6 + $0x118] sm:$0xff]
    %v106 = vld [vmem:[#allocation6 + $0x120] sm:$0xff]
    %v107 = vld [vmem:[#allocation6 + $0x128] sm:$0xff]
    %v108 = vld [vmem:[#allocation6 + $0x130] sm:$0xff]
    %v109 = vld [vmem:[#allocation6 + $0x138] sm:$0xff]
    %v110 = vld [vmem:[#allocation6 + $0x140] sm:$0xff]
    %v111 = vld [vmem:[#allocation6 + $0x148] sm:$0xff]
    %v112 = vld [vmem:[#allocation6 + $0x150] sm:$0xff]
    %v113 = vld [vmem:[#allocation6 + $0x158] sm:$0xff]
    %v114 = vld [vmem:[#allocation6 + $0x160] sm:$0xff]
    %v115 = vld [vmem:[#allocation6 + $0x168] sm:$0xff]
    %v116 = vld [vmem:[#allocation6 + $0x170] sm:$0xff]
    %v117 = vld [vmem:[#allocation6 + $0x178] sm:$0xff]
    %v118 = vld [vmem:[%s3] sm:$0x7]
    %v120 = vlaneseq
    %v121 = vshrl.u32 %v120, 7
    %v122 = vsub.s32 0, %v121
    %v123 = vrot.slane %v118, %v122
    %v124 = vlaneseq
    %v125 = vshrl.u32 %v124, 7
    %v126 = vsub.s32 1, %v125
    %v127 = vrot.slane %v118, %v126
    %v128 = vlaneseq
    %v129 = vshrl.u32 %v128, 7
    %v130 = vsub.s32 2, %v129
    %v131 = vrot.slane %v118, %v130
    %135 = vmatprep.subr.mxu0 %v71
    %136 = vmatpush1.msra.mxu0 %v70
    %137 = vmatprep.subr.mxu0 %v74
    %138 = vmatpush1.msra.mxu0 %v73
    %139 = vmatprep.subr.mxu0 %v77
    %140 = vmatpush1.msra.mxu0 %v76
    %141 = vmatprep.subr.mxu0 %v80
    %142 = vmatpush1.msra.mxu0 %v79
    %143 = vmatprep.subr.mxu0 %v83
    %144 = vmatpush1.msra.mxu0 %v82
    %145 = vmatprep.subr.mxu0 %v86
    %146 = vmatpush1.msra.mxu0 %v85
    %147 = vmatprep.subr.mxu0 %v89
    %148 = vmatpush1.msra.mxu0 %v88
    %149 = vmatprep.subr.mxu0 %v92
    %150 = vmatpush1.msra.mxu0 %v91
    %151 = vmatprep.subr.mxu0 %v95
    %152 = vmatpush1.msra.mxu0 %v94
    %153 = vmatprep.subr.mxu0 %v98
    %154 = vmatpush1.msra.mxu0 %v97
    %155 = vmatprep.subr.mxu0 %v101
    %156 = vmatpush1.msra.mxu0 %v100
    %157 = vmatprep.subr.mxu0 %v104
    %158 = vmatpush1.msra.mxu0 %v103
    %159 = vmatprep.subr.mxu0 %v107
    %160 = vmatpush1.msra.mxu0 %v106
    %161 = vmatprep.subr.mxu0 %v110
    %162 = vmatpush1.msra.mxu0 %v109
    %163 = vmatprep.subr.mxu0 %v113
    %164 = vmatpush1.msra.mxu0 %v112
    %165 = vmatprep.subr.mxu0 %v116
    %166 = vmatpush1.msra.mxu0 %v115
    %167 = vmatprep.subr.mxu0 0.0
    %168 = vmatpush1.msra.mxu0 0.0
    %169 = vmatprep.subr.mxu0 0.0
    %170 = vmatpush1.msra.mxu0 0.0
    %171 = vmatprep.subr.mxu0 0.0
    %172 = vmatpush1.msra.mxu0 0.0
    %173 = vmatprep.subr.mxu0 0.0
    %174 = vmatpush1.msra.mxu0 0.0
    %175 = vmatprep.subr.mxu0 0.0
    %176 = vmatpush1.msra.mxu0 0.0
    %177 = vmatprep.subr.mxu0 0.0
    %178 = vmatpush1.msra.mxu0 0.0
    %179 = vmatprep.subr.mxu0 0.0
    %180 = vmatpush1.msra.mxu0 0.0
    %181 = vmatprep.subr.mxu0 0.0
    %182 = vmatpush1.msra.mxu0 0.0
    %183 = vmatprep.subr.mxu0 0.0
    %184 = vmatpush1.msra.mxu0 0.0
    %185 = vmatprep.subr.mxu0 0.0
    %186 = vmatpush1.msra.mxu0 0.0
    %187 = vmatprep.subr.mxu0 0.0
    %188 = vmatpush1.msra.mxu0 0.0
    %189 = vmatprep.subr.mxu0 0.0
    %190 = vmatpush1.msra.mxu0 0.0
    %191 = vmatprep.subr.mxu0 0.0
    %192 = vmatpush1.msra.mxu0 0.0
    %193 = vmatprep.subr.mxu0 0.0
    %194 = vmatpush1.msra.mxu0 0.0
    %195 = vmatprep.subr.mxu0 0.0
    %196 = vmatpush1.msra.mxu0 0.0
    %197 = vmatprep.subr.mxu0 0.0
    %198 = vmatpush1.msra.mxu0 0.0
    %199 = vmatprep.mubr.f32.mxu0 0.0
    %200 = vmatmul.mubr.f32.gmra.mrb[0].mxu0 %v62
    %v201 = vpop.f32.mrb[0].mxu0
    %v202 = vadd.f32 %v123, %v201
    %v203 = vpop.f32.mrb[0].mxu0
    %v204 = vadd.f32 %v127, %v203
    %205 = vmatprep.mubr.f32.mxu0 0.0
    %206 = vmatmul.mubr.f32.gmra.mrb[0].mxu0 %v63
    %v207 = vpop.f32.mrb[0].mxu0
    %v208 = vadd.f32 %v123, %v207
    %v209 = vpop.f32.mrb[0].mxu0
    %v210 = vadd.f32 %v127, %v209
    %211 = vmatprep.mubr.f32.mxu0 0.0
    %212 = vmatmul.mubr.f32.gmra.mrb[0].mxu0 %v64
    %v213 = vpop.f32.mrb[0].mxu0
    %v214 = vadd.f32 %v123, %v213
    %v215 = vpop.f32.mrb[0].mxu0
    %v216 = vadd.f32 %v127, %v215
    %217 = vmatprep.mubr.f32.mxu0 0.0
    %218 = vmatmul.mubr.f32.gmra.mrb[0].mxu0 %v65
    %v219 = vpop.f32.mrb[0].mxu0
    %v220 = vadd.f32 %v123, %v219
    %v221 = vpop.f32.mrb[0].mxu0
    %v222 = vadd.f32 %v127, %v221
    %223 = vmatprep.mubr.f32.mxu0 0.0
    %224 = vmatmul.mubr.f32.gmra.mrb[0].mxu0 %v66
    %v225 = vpop.f32.mrb[0].mxu0
    %v226 = vadd.f32 %v123, %v225
    %v227 = vpop.f32.mrb[0].mxu0
    %v228 = vadd.f32 %v127, %v227
    %229 = vmatprep.mubr.f32.mxu0 0.0
    %230 = vmatmul.mubr.f32.gmra.mrb[0].mxu0 %v67
    %v231 = vpop.f32.mrb[0].mxu0
    %v232 = vadd.f32 %v123, %v231
    %v233 = vpop.f32.mrb[0].mxu0
    %v234 = vadd.f32 %v127, %v233
    %235 = vmatprep.mubr.f32.mxu0 0.0
    %236 = vmatmul.mubr.f32.gmra.mrb[0].mxu0 %v68
    %v237 = vpop.f32.mrb[0].mxu0
    %v238 = vadd.f32 %v123, %v237
    %v239 = vpop.f32.mrb[0].mxu0
    %v240 = vadd.f32 %v127, %v239
    %241 = vmatprep.mubr.f32.mxu0 0.0
    %242 = vmatmul.mubr.f32.gmra.mrb[0].mxu0 %v69
    %v243 = vpop.f32.mrb[0].mxu0
    %v244 = vadd.f32 %v123, %v243
    %v245 = vpop.f32.mrb[0].mxu0
    %v246 = vadd.f32 %v127, %v245
    %247 = vdwg.mxu0
    %248 = vmatprep.subr.mxu0 0.0
    %249 = vmatpush1.msra.mxu0 %v72
    %250 = vmatprep.subr.mxu0 0.0
    %251 = vmatpush1.msra.mxu0 %v75
    %252 = vmatprep.subr.mxu0 0.0
    %253 = vmatpush1.msra.mxu0 %v78
    %254 = vmatprep.subr.mxu0 0.0
    %255 = vmatpush1.msra.mxu0 %v81
    %256 = vmatprep.subr.mxu0 0.0
    %257 = vmatpush1.msra.mxu0 %v84
    %258 = vmatprep.subr.mxu0 0.0
    %259 = vmatpush1.msra.mxu0 %v87
    %260 = vmatprep.subr.mxu0 0.0
    %261 = vmatpush1.msra.mxu0 %v90
    %262 = vmatprep.subr.mxu0 0.0
    %263 = vmatpush1.msra.mxu0 %v93
    %264 = vmatprep.subr.mxu0 0.0
    %265 = vmatpush1.msra.mxu0 %v96
    %266 = vmatprep.subr.mxu0 0.0
    %267 = vmatpush1.msra.mxu0 %v99
    %268 = vmatprep.subr.mxu0 0.0
    %269 = vmatpush1.msra.mxu0 %v102
    %270 = vmatprep.subr.mxu0 0.0
    %271 = vmatpush1.msra.mxu0 %v105
    %272 = vmatprep.subr.mxu0 0.0
    %273 = vmatpush1.msra.mxu0 %v108
    %274 = vmatprep.subr.mxu0 0.0
    %275 = vmatpush1.msra.mxu0 %v111
    %276 = vmatprep.subr.mxu0 0.0
    %277 = vmatpush1.msra.mxu0 %v114
    %278 = vmatprep.subr.mxu0 0.0
    %279 = vmatpush1.msra.mxu0 %v117
    %280 = vmatprep.subr.mxu0 0.0
    %281 = vmatpush1.msra.mxu0 0.0
    %282 = vmatprep.subr.mxu0 0.0
    %283 = vmatpush1.msra.mxu0 0.0
    %284 = vmatprep.subr.mxu0 0.0
    %285 = vmatpush1.msra.mxu0 0.0
    %286 = vmatprep.subr.mxu0 0.0
    %287 = vmatpush1.msra.mxu0 0.0
    %288 = vmatprep.subr.mxu0 0.0
    %289 = vmatpush1.msra.mxu0 0.0
    %290 = vmatprep.subr.mxu0 0.0
    %291 = vmatpush1.msra.mxu0 0.0
    %292 = vmatprep.subr.mxu0 0.0
    %293 = vmatpush1.msra.mxu0 0.0
    %294 = vmatprep.subr.mxu0 0.0
    %295 = vmatpush1.msra.mxu0 0.0
    %296 = vmatprep.subr.mxu0 0.0
    %297 = vmatpush1.msra.mxu0 0.0
    %298 = vmatprep.subr.mxu0 0.0
    %299 = vmatpush1.msra.mxu0 0.0
    %300 = vmatprep.subr.mxu0 0.0
    %301 = vmatpush1.msra.mxu0 0.0
    %302 = vmatprep.subr.mxu0 0.0
    %303 = vmatpush1.msra.mxu0 0.0
    %304 = vmatprep.subr.mxu0 0.0
    %305 = vmatpush1.msra.mxu0 0.0
    %306 = vmatprep.subr.mxu0 0.0
    %307 = vmatpush1.msra.mxu0 0.0
    %308 = vmatprep.subr.mxu0 0.0
    %309 = vmatpush1.msra.mxu0 0.0
    %310 = vmatprep.subr.mxu0 0.0
    %311 = vmatpush1.msra.mxu0 0.0
    %312 = vmatprep.mubr.f32.mxu0 0.0
    %313 = vmatmul.mubr.f32.gmra.mrb[0].mxu0 %v62
    %v314 = vpop.f32.mrb[0].mxu0
    %v315 = vadd.f32 %v131, %v314
    %v316 = vpop.f32.mrb[0].mxu0
    %317 = vmatprep.mubr.f32.mxu0 0.0
    %318 = vmatmul.mubr.f32.gmra.mrb[0].mxu0 %v63
    %v319 = vpop.f32.mrb[0].mxu0
    %v320 = vadd.f32 %v131, %v319
    %v321 = vpop.f32.mrb[0].mxu0
    %322 = vmatprep.mubr.f32.mxu0 0.0
    %323 = vmatmul.mubr.f32.gmra.mrb[0].mxu0 %v64
    %v324 = vpop.f32.mrb[0].mxu0
    %v325 = vadd.f32 %v131, %v324
    %v326 = vpop.f32.mrb[0].mxu0
    %327 = vmatprep.mubr.f32.mxu0 0.0
    %328 = vmatmul.mubr.f32.gmra.mrb[0].mxu0 %v65
    %v329 = vpop.f32.mrb[0].mxu0
    %v330 = vadd.f32 %v131, %v329
    %v331 = vpop.f32.mrb[0].mxu0
    %332 = vmatprep.mubr.f32.mxu0 0.0
    %333 = vmatmul.mubr.f32.gmra.mrb[0].mxu0 %v66
    %v334 = vpop.f32.mrb[0].mxu0
    %v335 = vadd.f32 %v131, %v334
    %v336 = vpop.f32.mrb[0].mxu0
    %337 = vmatprep.mubr.f32.mxu0 0.0
    %338 = vmatmul.mubr.f32.gmra.mrb[0].mxu0 %v67
    %v339 = vpop.f32.mrb[0].mxu0
    %v340 = vadd.f32 %v131, %v339
    %v341 = vpop.f32.mrb[0].mxu0
    %342 = vmatprep.mubr.f32.mxu0 0.0
    %343 = vmatmul.mubr.f32.gmra.mrb[0].mxu0 %v68
    %v344 = vpop.f32.mrb[0].mxu0
    %v345 = vadd.f32 %v131, %v344
    %v346 = vpop.f32.mrb[0].mxu0
    %347 = vmatprep.mubr.f32.mxu0 0.0
    %348 = vmatmul.mubr.f32.gmra.mrb[0].mxu0 %v69
    %v349 = vpop.f32.mrb[0].mxu0
    %v350 = vadd.f32 %v131, %v349
    %v351 = vpop.f32.mrb[0].mxu0
    %352 = vdwg.mxu0
    %353 = vst [vmem:[#allocation2] sm:$0xff] %v202
    %354 = vst [vmem:[#allocation2 + $0x8] sm:$0xff] %v204
    %355 = vst [vmem:[#allocation2 + $0x10] sm:$0xff] %v315
    %356 = vst [vmem:[#allocation2 + $0x18] sm:$0xff] %v208
    %357 = vst [vmem:[#allocation2 + $0x20] sm:$0xff] %v210
    %358 = vst [vmem:[#allocation2 + $0x28] sm:$0xff] %v320
    %359 = vst [vmem:[#allocation2 + $0x30] sm:$0xff] %v214
    %360 = vst [vmem:[#allocation2 + $0x38] sm:$0xff] %v216
    %361 = vst [vmem:[#allocation2 + $0x40] sm:$0xff] %v325
    %362 = vst [vmem:[#allocation2 + $0x48] sm:$0xff] %v220
    %363 = vst [vmem:[#allocation2 + $0x50] sm:$0xff] %v222
    %364 = vst [vmem:[#allocation2 + $0x58] sm:$0xff] %v330
    %365 = vst [vmem:[#allocation2 + $0x60] sm:$0xff] %v226
    %366 = vst [vmem:[#allocation2 + $0x68] sm:$0xff] %v228
    %367 = vst [vmem:[#allocation2 + $0x70] sm:$0xff] %v335
    %368 = vst [vmem:[#allocation2 + $0x78] sm:$0xff] %v232
    %369 = vst [vmem:[#allocation2 + $0x80] sm:$0xff] %v234
    %370 = vst [vmem:[#allocation2 + $0x88] sm:$0xff] %v340
    %371 = vst [vmem:[#allocation2 + $0x90] sm:$0xff] %v238
    %372 = vst [vmem:[#allocation2 + $0x98] sm:$0xff] %v240
    %373 = vst [vmem:[#allocation2 + $0xa0] sm:$0xff] %v345
    %374 = vst [vmem:[#allocation2 + $0xa8] sm:$0xff] %v244
    %375 = vst [vmem:[#allocation2 + $0xb0] sm:$0xff] %v246
    %376 = vst [vmem:[#allocation2 + $0xb8] sm:$0xff] %v350
    %v377 = vld [vmem:[#allocation2] sm:$0xff]
    %v378 = vld [vmem:[#allocation2 + $0x8] sm:$0xff]
    %v379 = vld [vmem:[#allocation2 + $0x10] sm:$0xff]
    %v380 = vld [vmem:[#allocation8] sm:$0xff]
    %v381 = vld [vmem:[#allocation8 + $0x8] sm:$0xff]
    %v382 = vld [vmem:[#allocation8 + $0x10] sm:$0xff]
    %v383 = vld [vmem:[#allocation8 + $0x18] sm:$0xff]
    %v384 = vld [vmem:[#allocation8 + $0x20] sm:$0xff]
    %v385 = vld [vmem:[#allocation8 + $0x28] sm:$0xff]
    %v386 = vld [vmem:[#allocation8 + $0x30] sm:$0xff]
    %v387 = vld [vmem:[#allocation8 + $0x38] sm:$0xff]
    %v388 = vld [vmem:[#allocation8 + $0x40] sm:$0xff]
    %v389 = vld [vmem:[#allocation8 + $0x48] sm:$0xff]
    %v390 = vld [vmem:[#allocation8 + $0x50] sm:$0xff]
    %v391 = vld [vmem:[#allocation8 + $0x58] sm:$0xff]
    %v392 = vld [vmem:[#allocation8 + $0x60] sm:$0xff]
    %v393 = vld [vmem:[#allocation8 + $0x68] sm:$0xff]
    %v394 = vld [vmem:[#allocation8 + $0x70] sm:$0xff]
    %v395 = vld [vmem:[#allocation8 + $0x78] sm:$0xff]
    %v396 = vld [vmem:[#allocation8 + $0x80] sm:$0xff]
    %v397 = vld [vmem:[#allocation8 + $0x88] sm:$0xff]
    %v398 = vld [vmem:[#allocation8 + $0x90] sm:$0xff]
    %v399 = vld [vmem:[#allocation8 + $0x98] sm:$0xff]
    %v400 = vld [vmem:[#allocation8 + $0xa0] sm:$0xff]
    %v401 = vld [vmem:[#allocation8 + $0xa8] sm:$0xff]
    %v402 = vld [vmem:[#allocation8 + $0xb0] sm:$0xff]
    %v403 = vld [vmem:[#allocation8 + $0xb8] sm:$0xff]
    %v404 = vld [vmem:[#allocation8 + $0xc0] sm:$0xff]
    %v405 = vld [vmem:[#allocation8 + $0xc8] sm:$0xff]
    %v406 = vld [vmem:[#allocation8 + $0xd0] sm:$0xff]
    %v407 = vld [vmem:[#allocation8 + $0xd8] sm:$0xff]
    %v408 = vld [vmem:[#allocation8 + $0xe0] sm:$0xff]
    %v409 = vld [vmem:[#allocation8 + $0xe8] sm:$0xff]
    %v410 = vld [vmem:[#allocation8 + $0xf0] sm:$0xff]
    %v411 = vld [vmem:[#allocation8 + $0xf8] sm:$0xff]
    %v412 = vld [vmem:[#allocation8 + $0x100] sm:$0xff]
    %v413 = vld [vmem:[#allocation8 + $0x108] sm:$0xff]
    %v414 = vld [vmem:[#allocation8 + $0x110] sm:$0xff]
    %v415 = vld [vmem:[#allocation8 + $0x118] sm:$0xff]
    %v416 = vld [vmem:[#allocation8 + $0x120] sm:$0xff]
    %v417 = vld [vmem:[#allocation8 + $0x128] sm:$0xff]
    %v418 = vld [vmem:[#allocation8 + $0x130] sm:$0xff]
    %v419 = vld [vmem:[#allocation8 + $0x138] sm:$0xff]
    %v420 = vld [vmem:[#allocation8 + $0x140] sm:$0xff]
    %v421 = vld [vmem:[#allocation8 + $0x148] sm:$0xff]
    %v422 = vld [vmem:[#allocation8 + $0x150] sm:$0xff]
    %v423 = vld [vmem:[#allocation8 + $0x158] sm:$0xff]
    %v424 = vld [vmem:[#allocation8 + $0x160] sm:$0xff]
    %v425 = vld [vmem:[#allocation8 + $0x168] sm:$0xff]
    %v426 = vld [vmem:[#allocation8 + $0x170] sm:$0xff]
    %v427 = vld [vmem:[#allocation8 + $0x178] sm:$0xff]
    %428 = vmatprep.subr.mxu0 %v381
    %429 = vmatpush1.msra.mxu0 %v380
    %430 = vmatprep.subr.mxu0 %v384
    %431 = vmatpush1.msra.mxu0 %v383
    %432 = vmatprep.subr.mxu0 %v387
    %433 = vmatpush1.msra.mxu0 %v386
    %434 = vmatprep.subr.mxu0 %v390
    %435 = vmatpush1.msra.mxu0 %v389
    %436 = vmatprep.subr.mxu0 %v393
    %437 = vmatpush1.msra.mxu0 %v392
    %438 = vmatprep.subr.mxu0 %v396
    %439 = vmatpush1.msra.mxu0 %v395
    %440 = vmatprep.subr.mxu0 %v399
    %441 = vmatpush1.msra.mxu0 %v398
    %442 = vmatprep.subr.mxu0 %v402
    %443 = vmatpush1.msra.mxu0 %v401
    %444 = vmatprep.subr.mxu0 %v405
    %445 = vmatpush1.msra.mxu0 %v404
    %446 = vmatprep.subr.mxu0 %v408
    %447 = vmatpush1.msra.mxu0 %v407
    %448 = vmatprep.subr.mxu0 %v411
    %449 = vmatpush1.msra.mxu0 %v410
    %450 = vmatprep.subr.mxu0 %v414
    %451 = vmatpush1.msra.mxu0 %v413
    %452 = vmatprep.subr.mxu0 %v417
    %453 = vmatpush1.msra.mxu0 %v416
    %454 = vmatprep.subr.mxu0 %v420
    %455 = vmatpush1.msra.mxu0 %v419
    %456 = vmatprep.subr.mxu0 %v423
    %457 = vmatpush1.msra.mxu0 %v422
    %458 = vmatprep.subr.mxu0 %v426
    %459 = vmatpush1.msra.mxu0 %v425
    %460 = vmatprep.subr.mxu0 0.0
    %461 = vmatpush1.msra.mxu0 0.0
    %462 = vmatprep.subr.mxu0 0.0
    %463 = vmatpush1.msra.mxu0 0.0
    %464 = vmatprep.subr.mxu0 0.0
    %465 = vmatpush1.msra.mxu0 0.0
    %466 = vmatprep.subr.mxu0 0.0
    %467 = vmatpush1.msra.mxu0 0.0
    %468 = vmatprep.subr.mxu0 0.0
    %469 = vmatpush1.msra.mxu0 0.0
    %470 = vmatprep.subr.mxu0 0.0
    %471 = vmatpush1.msra.mxu0 0.0
    %472 = vmatprep.subr.mxu0 0.0
    %473 = vmatpush1.msra.mxu0 0.0
    %474 = vmatprep.subr.mxu0 0.0
    %475 = vmatpush1.msra.mxu0 0.0
    %476 = vmatprep.subr.mxu0 0.0
    %477 = vmatpush1.msra.mxu0 0.0
    %478 = vmatprep.subr.mxu0 0.0
    %479 = vmatpush1.msra.mxu0 0.0
    %480 = vmatprep.subr.mxu0 0.0
    %481 = vmatpush1.msra.mxu0 0.0
    %482 = vmatprep.subr.mxu0 0.0
    %483 = vmatpush1.msra.mxu0 0.0
    %484 = vmatprep.subr.mxu0 0.0
    %485 = vmatpush1.msra.mxu0 0.0
    %486 = vmatprep.subr.mxu0 0.0
    %487 = vmatpush1.msra.mxu0 0.0
    %488 = vmatprep.subr.mxu0 0.0
    %489 = vmatpush1.msra.mxu0 0.0
    %490 = vmatprep.subr.mxu0 0.0
    %491 = vmatpush1.msra.mxu0 0.0
    %492 = vmatprep.mubr.f32.mxu0 0.0
    %493 = vmatmul.mubr.f32.gmra.mrb[0].mxu0 0.0
    %v494 = vpop.f32.mrb[0].mxu0
    %v495 = vadd.f32 0.0, %v494
    %v496 = vpop.f32.mrb[0].mxu0
    %v497 = vadd.f32 0.0, %v496
    %498 = vdwg.mxu0
    %499 = vmatprep.subr.mxu0 0.0
    %500 = vmatpush1.msra.mxu0 %v382
    %501 = vmatprep.subr.mxu0 0.0
    %502 = vmatpush1.msra.mxu0 %v385
    %503 = vmatprep.subr.mxu0 0.0
    %504 = vmatpush1.msra.mxu0 %v388
    %505 = vmatprep.subr.mxu0 0.0
    %506 = vmatpush1.msra.mxu0 %v391
    %507 = vmatprep.subr.mxu0 0.0
    %508 = vmatpush1.msra.mxu0 %v394
    %509 = vmatprep.subr.mxu0 0.0
    %510 = vmatpush1.msra.mxu0 %v397
    %511 = vmatprep.subr.mxu0 0.0
    %512 = vmatpush1.msra.mxu0 %v400
    %513 = vmatprep.subr.mxu0 0.0
    %514 = vmatpush1.msra.mxu0 %v403
    %515 = vmatprep.subr.mxu0 0.0
    %516 = vmatpush1.msra.mxu0 %v406
    %517 = vmatprep.subr.mxu0 0.0
    %518 = vmatpush1.msra.mxu0 %v409
    %519 = vmatprep.subr.mxu0 0.0
    %520 = vmatpush1.msra.mxu0 %v412
    %521 = vmatprep.subr.mxu0 0.0
    %522 = vmatpush1.msra.mxu0 %v415
    %523 = vmatprep.subr.mxu0 0.0
    %524 = vmatpush1.msra.mxu0 %v418
    %525 = vmatprep.subr.mxu0 0.0
    %526 = vmatpush1.msra.mxu0 %v421
    %527 = vmatprep.subr.mxu0 0.0
    %528 = vmatpush1.msra.mxu0 %v424
    %529 = vmatprep.subr.mxu0 0.0
    %530 = vmatpush1.msra.mxu0 %v427
    %531 = vmatprep.subr.mxu0 0.0
    %532 = vmatpush1.msra.mxu0 0.0
    %533 = vmatprep.subr.mxu0 0.0
    %534 = vmatpush1.msra.mxu0 0.0
    %535 = vmatprep.subr.mxu0 0.0
    %536 = vmatpush1.msra.mxu0 0.0
    %537 = vmatprep.subr.mxu0 0.0
    %538 = vmatpush1.msra.mxu0 0.0
    %539 = vmatprep.subr.mxu0 0.0
    %540 = vmatpush1.msra.mxu0 0.0
    %541 = vmatprep.subr.mxu0 0.0
    %542 = vmatpush1.msra.mxu0 0.0
    %543 = vmatprep.subr.mxu0 0.0
    %544 = vmatpush1.msra.mxu0 0.0
    %545 = vmatprep.subr.mxu0 0.0
    %546 = vmatpush1.msra.mxu0 0.0
    %547 = vmatprep.subr.mxu0 0.0
    %548 = vmatpush1.msra.mxu0 0.0
    %549 = vmatprep.subr.mxu0 0.0
    %550 = vmatpush1.msra.mxu0 0.0
    %551 = vmatprep.subr.mxu0 0.0
    %552 = vmatpush1.msra.mxu0 0.0
    %553 = vmatprep.subr.mxu0 0.0
    %554 = vmatpush1.msra.mxu0 0.0
    %555 = vmatprep.subr.mxu0 0.0
    %556 = vmatpush1.msra.mxu0 0.0
    %557 = vmatprep.subr.mxu0 0.0
    %558 = vmatpush1.msra.mxu0 0.0
    %559 = vmatprep.subr.mxu0 0.0
    %560 = vmatpush1.msra.mxu0 0.0
    %561 = vmatprep.subr.mxu0 0.0
    %562 = vmatpush1.msra.mxu0 0.0
    %563 = vmatprep.mubr.f32.mxu0 0.0
    %564 = vmatmul.mubr.f32.gmra.mrb[0].mxu0 0.0
    %v565 = vpop.f32.mrb[0].mxu0
    %v566 = vadd.f32 0.0, %v565
    %v567 = vpop.f32.mrb[0].mxu0
    %568 = vdwg.mxu0
    %v569 = vadd.f32 %v377, %v495
    %v570 = vxor.u32 %v569, 2147483648
    %v571 = vmul.f32 %v570, 1.442695
    %v572 = vpow.pop %v571
    %v573 = vadd.f32 %v572, 1.0
    %v574 = vrcp.pop %v573
    %v575 = vmul.f32 1.0, %v574
    %v576 = vadd.f32 %v378, %v497
    %v577 = vxor.u32 %v576, 2147483648
    %v578 = vmul.f32 %v577, 1.442695
    %v579 = vpow.pop %v578
    %v580 = vadd.f32 %v579, 1.0
    %v581 = vrcp.pop %v580
    %v582 = vmul.f32 1.0, %v581
    %v583 = vld [vmem:[%s4] sm:$0x1]
    %v585 = vlaneseq
    %v586 = vshrl.u32 %v585, 7
    %v587 = vsub.s32 0, %v586
    %v588 = vrot.slane %v583, %v587
    %v590 = vadd.f32 %v566, %v588
    %v591 = vmul.f32 %v575, %v590
    %v592 = vadd.f32 %v379, %v591
    %v593 = vtanh.pop %v592
    %v594 = vsub.f32 1.0, %v582
    %v595 = vmul.f32 %v594, %v593
    %v596 = vmul.f32 %v582, 0.0
    %v597 = vadd.f32 %v595, %v596
    %598 = vst [vmem:[#allocation9] sm:$0xff] %v597
    %s599 = scalar_lea.vmem [#allocation2], 24
    %v600 = vld [vmem:[%s599] sm:$0xff]
    %v601 = vld [vmem:[%s599 + $0x8] sm:$0xff]
    %v602 = vld [vmem:[%s599 + $0x10] sm:$0xff]
    %v603 = vld [vmem:[#allocation8] sm:$0xff]
    %v604 = vld [vmem:[#allocation8 + $0x8] sm:$0xff]
    %v605 = vld [vmem:[#allocation8 + $0x10] sm:$0xff]
    %v606 = vld [vmem:[#allocation8 + $0x18] sm:$0xff]
    %v607 = vld [vmem:[#allocation8 + $0x20] sm:$0xff]
    %v608 = vld [vmem:[#allocation8 + $0x28] sm:$0xff]
    %v609 = vld [vmem:[#allocation8 + $0x30] sm:$0xff]
    %v610 = vld [vmem:[#allocation8 + $0x38] sm:$0xff]
    %v611 = vld [vmem:[#allocation8 + $0x40] sm:$0xff]
    %v612 = vld [vmem:[#allocation8 + $0x48] sm:$0xff]
    %v613 = vld [vmem:[#allocation8 + $0x50] sm:$0xff]
    %v614 = vld [vmem:[#allocation8 + $0x58] sm:$0xff]
    %v615 = vld [vmem:[#allocation8 + $0x60] sm:$0xff]
    %v616 = vld [vmem:[#allocation8 + $0x68] sm:$0xff]
    %v617 = vld [vmem:[#allocation8 + $0x70] sm:$0xff]
    %v618 = vld [vmem:[#allocation8 + $0x78] sm:$0xff]
    %v619 = vld [vmem:[#allocation8 + $0x80] sm:$0xff]
    %v620 = vld [vmem:[#allocation8 + $0x88] sm:$0xff]
    %v621 = vld [vmem:[#allocation8 + $0x90] sm:$0xff]
    %v622 = vld [vmem:[#allocation8 + $0x98] sm:$0xff]
    %v623 = vld [vmem:[#allocation8 + $0xa0] sm:$0xff]
    %v624 = vld [vmem:[#allocation8 + $0xa8] sm:$0xff]
    %v625 = vld [vmem:[#allocation8 + $0xb0] sm:$0xff]
    %v626 = vld [vmem:[#allocation8 + $0xb8] sm:$0xff]
    %v627 = vld [vmem:[#allocation8 + $0xc0] sm:$0xff]
    %v628 = vld [vmem:[#allocation8 + $0xc8] sm:$0xff]
    %v629 = vld [vmem:[#allocation8 + $0xd0] sm:$0xff]
    %v630 = vld [vmem:[#allocation8 + $0xd8] sm:$0xff]
    %v631 = vld [vmem:[#allocation8 + $0xe0] sm:$0xff]
    %v632 = vld [vmem:[#allocation8 + $0xe8] sm:$0xff]
    %v633 = vld [vmem:[#allocation8 + $0xf0] sm:$0xff]
    %v634 = vld [vmem:[#allocation8 + $0xf8] sm:$0xff]
    %v635 = vld [vmem:[#allocation8 + $0x100] sm:$0xff]
    %v636 = vld [vmem:[#allocation8 + $0x108] sm:$0xff]
    %v637 = vld [vmem:[#allocation8 + $0x110] sm:$0xff]
    %v638 = vld [vmem:[#allocation8 + $0x118] sm:$0xff]
    %v639 = vld [vmem:[#allocation8 + $0x120] sm:$0xff]
    %v640 = vld [vmem:[#allocation8 + $0x128] sm:$0xff]
    %v641 = vld [vmem:[#allocation8 + $0x130] sm:$0xff]
    %v642 = vld [vmem:[#allocation8 + $0x138] sm:$0xff]
    %v643 = vld [vmem:[#allocation8 + $0x140] sm:$0xff]
    %v644 = vld [vmem:[#allocation8 + $0x148] sm:$0xff]
    %v645 = vld [vmem:[#allocation8 + $0x150] sm:$0xff]
    %v646 = vld [vmem:[#allocation8 + $0x158] sm:$0xff]
    %v647 = vld [vmem:[#allocation8 + $0x160] sm:$0xff]
    %v648 = vld [vmem:[#allocation8 + $0x168] sm:$0xff]
    %v649 = vld [vmem:[#allocation8 + $0x170] sm:$0xff]
    %v650 = vld [vmem:[#allocation8 + $0x178] sm:$0xff]
    %651 = vmatprep.subr.mxu0 %v604
    %652 = vmatpush1.msra.mxu0 %v603
    %653 = vmatprep.subr.mxu0 %v607
    %654 = vmatpush1.msra.mxu0 %v606
    %655 = vmatprep.subr.mxu0 %v610
    %656 = vmatpush1.msra.mxu0 %v609
    %657 = vmatprep.subr.mxu0 %v613
    %658 = vmatpush1.msra.mxu0 %v612
    %659 = vmatprep.subr.mxu0 %v616
    %660 = vmatpush1.msra.mxu0 %v615
    %661 = vmatprep.subr.mxu0 %v619
    %662 = vmatpush1.msra.mxu0 %v618
    %663 = vmatprep.subr.mxu0 %v622
    %664 = vmatpush1.msra.mxu0 %v621
    %665 = vmatprep.subr.mxu0 %v625
    %666 = vmatpush1.msra.mxu0 %v624
    %667 = vmatprep.subr.mxu0 %v628
    %668 = vmatpush1.msra.mxu0 %v627
    %669 = vmatprep.subr.mxu0 %v631
    %670 = vmatpush1.msra.mxu0 %v630
    %671 = vmatprep.subr.mxu0 %v634
    %672 = vmatpush1.msra.mxu0 %v633
    %673 = vmatprep.subr.mxu0 %v637
    %674 = vmatpush1.msra.mxu0 %v636
    %675 = vmatprep.subr.mxu0 %v640
    %676 = vmatpush1.msra.mxu0 %v639
    %677 = vmatprep.subr.mxu0 %v643
    %678 = vmatpush1.msra.mxu0 %v642
    %679 = vmatprep.subr.mxu0 %v646
    %680 = vmatpush1.msra.mxu0 %v645
    %681 = vmatprep.subr.mxu0 %v649
    %682 = vmatpush1.msra.mxu0 %v648
    %683 = vmatprep.subr.mxu0 0.0
    %684 = vmatpush1.msra.mxu0 0.0
    %685 = vmatprep.subr.mxu0 0.0
    %686 = vmatpush1.msra.mxu0 0.0
    %687 = vmatprep.subr.mxu0 0.0
    %688 = vmatpush1.msra.mxu0 0.0
    %689 = vmatprep.subr.mxu0 0.0
    %690 = vmatpush1.msra.mxu0 0.0
    %691 = vmatprep.subr.mxu0 0.0
    %692 = vmatpush1.msra.mxu0 0.0
    %693 = vmatprep.subr.mxu0 0.0
    %694 = vmatpush1.msra.mxu0 0.0
    %695 = vmatprep.subr.mxu0 0.0
    %696 = vmatpush1.msra.mxu0 0.0
    %697 = vmatprep.subr.mxu0 0.0
    %698 = vmatpush1.msra.mxu0 0.0
    %699 = vmatprep.subr.mxu0 0.0
    %700 = vmatpush1.msra.mxu0 0.0
    %701 = vmatprep.subr.mxu0 0.0
    %702 = vmatpush1.msra.mxu0 0.0
    %703 = vmatprep.subr.mxu0 0.0
    %704 = vmatpush1.msra.mxu0 0.0
    %705 = vmatprep.subr.mxu0 0.0
    %706 = vmatpush1.msra.mxu0 0.0
    %707 = vmatprep.subr.mxu0 0.0
    %708 = vmatpush1.msra.mxu0 0.0
    %709 = vmatprep.subr.mxu0 0.0
    %710 = vmatpush1.msra.mxu0 0.0
    %711 = vmatprep.subr.mxu0 0.0
    %712 = vmatpush1.msra.mxu0 0.0
    %713 = vmatprep.subr.mxu0 0.0
    %714 = vmatpush1.msra.mxu0 0.0
    %715 = vmatprep.mubr.f32.mxu0 0.0
    %716 = vmatmul.mubr.f32.gmra.mrb[0].mxu0 %v597
    %v717 = vpop.f32.mrb[0].mxu0
    %v718 = vadd.f32 0.0, %v717
    %v719 = vpop.f32.mrb[0].mxu0
    %v720 = vadd.f32 0.0, %v719
    %721 = vdwg.mxu0
    %722 = vmatprep.subr.mxu0 0.0
    %723 = vmatpush1.msra.mxu0 %v605
    %724 = vmatprep.subr.mxu0 0.0
    %725 = vmatpush1.msra.mxu0 %v608
    %726 = vmatprep.subr.mxu0 0.0
    %727 = vmatpush1.msra.mxu0 %v611
    %728 = vmatprep.subr.mxu0 0.0
    %729 = vmatpush1.msra.mxu0 %v614
    %730 = vmatprep.subr.mxu0 0.0
    %731 = vmatpush1.msra.mxu0 %v617
    %732 = vmatprep.subr.mxu0 0.0
    %733 = vmatpush1.msra.mxu0 %v620
    %734 = vmatprep.subr.mxu0 0.0
    %735 = vmatpush1.msra.mxu0 %v623
    %736 = vmatprep.subr.mxu0 0.0
    %737 = vmatpush1.msra.mxu0 %v626
    %738 = vmatprep.subr.mxu0 0.0
    %739 = vmatpush1.msra.mxu0 %v629
    %740 = vmatprep.subr.mxu0 0.0
    %741 = vmatpush1.msra.mxu0 %v632
    %742 = vmatprep.subr.mxu0 0.0
    %743 = vmatpush1.msra.mxu0 %v635
    %744 = vmatprep.subr.mxu0 0.0
    %745 = vmatpush1.msra.mxu0 %v638
    %746 = vmatprep.subr.mxu0 0.0
    %747 = vmatpush1.msra.mxu0 %v641
    %748 = vmatprep.subr.mxu0 0.0
    %749 = vmatpush1.msra.mxu0 %v644
    %750 = vmatprep.subr.mxu0 0.0
    %751 = vmatpush1.msra.mxu0 %v647
    %752 = vmatprep.subr.mxu0 0.0
    %753 = vmatpush1.msra.mxu0 %v650
    %754 = vmatprep.subr.mxu0 0.0
    %755 = vmatpush1.msra.mxu0 0.0
    %756 = vmatprep.subr.mxu0 0.0
    %757 = vmatpush1.msra.mxu0 0.0
    %758 = vmatprep.subr.mxu0 0.0
    %759 = vmatpush1.msra.mxu0 0.0
    %760 = vmatprep.subr.mxu0 0.0
    %761 = vmatpush1.msra.mxu0 0.0
    %762 = vmatprep.subr.mxu0 0.0
    %763 = vmatpush1.msra.mxu0 0.0
    %764 = vmatprep.subr.mxu0 0.0
    %765 = vmatpush1.msra.mxu0 0.0
    %766 = vmatprep.subr.mxu0 0.0
    %767 = vmatpush1.msra.mxu0 0.0
    %768 = vmatprep.subr.mxu0 0.0
    %769 = vmatpush1.msra.mxu0 0.0
    %770 = vmatprep.subr.mxu0 0.0
    %771 = vmatpush1.msra.mxu0 0.0
    %772 = vmatprep.subr.mxu0 0.0
    %773 = vmatpush1.msra.mxu0 0.0
    %774 = vmatprep.subr.mxu0 0.0
    %775 = vmatpush1.msra.mxu0 0.0
    %776 = vmatprep.subr.mxu0 0.0
    %777 = vmatpush1.msra.mxu0 0.0
    %778 = vmatprep.subr.mxu0 0.0
    %779 = vmatpush1.msra.mxu0 0.0
    %780 = vmatprep.subr.mxu0 0.0
    %781 = vmatpush1.msra.mxu0 0.0
    %782 = vmatprep.subr.mxu0 0.0
    %783 = vmatpush1.msra.mxu0 0.0
    %784 = vmatprep.subr.mxu0 0.0
    %785 = vmatpush1.msra.mxu0 0.0
    %786 = vmatprep.mubr.f32.mxu0 0.0
    %787 = vmatmul.mubr.f32.gmra.mrb[0].mxu0 %v597
    %v788 = vpop.f32.mrb[0].mxu0
    %v789 = vadd.f32 0.0, %v788
    %v790 = vpop.f32.mrb[0].mxu0
    %791 = vdwg.mxu0
    %v792 = vadd.f32 %v600, %v718
    %v793 = vxor.u32 %v792, 2147483648
    %v794 = vmul.f32 %v793, 1.442695
    %v795 = vpow.pop %v794
    %v796 = vadd.f32 %v795, 1.0
    %v797 = vrcp.pop %v796
    %v798 = vmul.f32 1.0, %v797
    %v799 = vadd.f32 %v601, %v720
    %v800 = vxor.u32 %v799, 2147483648
    %v801 = vmul.f32 %v800, 1.442695
    %v802 = vpow.pop %v801
    %v803 = vadd.f32 %v802, 1.0
    %v804 = vrcp.pop %v803
    %v805 = vmul.f32 1.0, %v804
    %v806 = vld [vmem:[%s4] sm:$0x1]
    %v808 = vlaneseq
    %v809 = vshrl.u32 %v808, 7
    %v810 = vsub.s32 0, %v809
    %v811 = vrot.slane %v806, %v810
    %v813 = vadd.f32 %v789, %v811
    %v814 = vmul.f32 %v798, %v813
    %v815 = vadd.f32 %v602, %v814
    %v816 = vtanh.pop %v815
    %v817 = vsub.f32 1.0, %v805
    %v818 = vmul.f32 %v817, %v816
    %v819 = vmul.f32 %v805, %v597
    %v820 = vadd.f32 %v818, %v819
    %s821 = scalar_lea.vmem [#allocation9], 8
    %822 = vst [vmem:[%s821] sm:$0xff] %v820
    %s823 = scalar_lea.vmem [#allocation2], 48
    %v824 = vld [vmem:[%s823] sm:$0xff]
    %v825 = vld [vmem:[%s823 + $0x8] sm:$0xff]
    %v826 = vld [vmem:[%s823 + $0x10] sm:$0xff]
    %v827 = vld [vmem:[#allocation8] sm:$0xff]
    %v828 = vld [vmem:[#allocation8 + $0x8] sm:$0xff]
    %v829 = vld [vmem:[#allocation8 + $0x10] sm:$0xff]
    %v830 = vld [vmem:[#allocation8 + $0x18] sm:$0xff]
    %v831 = vld [vmem:[#allocation8 + $0x20] sm:$0xff]
    %v832 = vld [vmem:[#allocation8 + $0x28] sm:$0xff]
    %v833 = vld [vmem:[#allocation8 + $0x30] sm:$0xff]
    %v834 = vld [vmem:[#allocation8 + $0x38] sm:$0xff]
    %v835 = vld [vmem:[#allocation8 + $0x40] sm:$0xff]
    %v836 = vld [vmem:[#allocation8 + $0x48] sm:$0xff]
    %v837 = vld [vmem:[#allocation8 + $0x50] sm:$0xff]
    %v838 = vld [vmem:[#allocation8 + $0x58] sm:$0xff]
    %v839 = vld [vmem:[#allocation8 + $0x60] sm:$0xff]
    %v840 = vld [vmem:[#allocation8 + $0x68] sm:$0xff]
    %v841 = vld [vmem:[#allocation8 + $0x70] sm:$0xff]
    %v842 = vld [vmem:[#allocation8 + $0x78] sm:$0xff]
    %v843 = vld [vmem:[#allocation8 + $0x80] sm:$0xff]
    %v844 = vld [vmem:[#allocation8 + $0x88] sm:$0xff]
    %v845 = vld [vmem:[#allocation8 + $0x90] sm:$0xff]
    %v846 = vld [vmem:[#allocation8 + $0x98] sm:$0xff]
    %v847 = vld [vmem:[#allocation8 + $0xa0] sm:$0xff]
    %v848 = vld [vmem:[#allocation8 + $0xa8] sm:$0xff]
    %v849 = vld [vmem:[#allocation8 + $0xb0] sm:$0xff]
    %v850 = vld [vmem:[#allocation8 + $0xb8] sm:$0xff]
    %v851 = vld [vmem:[#allocation8 + $0xc0] sm:$0xff]
    %v852 = vld [vmem:[#allocation8 + $0xc8] sm:$0xff]
    %v853 = vld [vmem:[#allocation8 + $0xd0] sm:$0xff]
    %v854 = vld [vmem:[#allocation8 + $0xd8] sm:$0xff]
    %v855 = vld [vmem:[#allocation8 + $0xe0] sm:$0xff]
    %v856 = vld [vmem:[#allocation8 + $0xe8] sm:$0xff]
    %v857 = vld [vmem:[#allocation8 + $0xf0] sm:$0xff]
    %v858 = vld [vmem:[#allocation8 + $0xf8] sm:$0xff]
    %v859 = vld [vmem:[#allocation8 + $0x100] sm:$0xff]
    %v860 = vld [vmem:[#allocation8 + $0x108] sm:$0xff]
    %v861 = vld [vmem:[#allocation8 + $0x110] sm:$0xff]
    %v862 = vld [vmem:[#allocation8 + $0x118] sm:$0xff]
    %v863 = vld [vmem:[#allocation8 + $0x120] sm:$0xff]
    %v864 = vld [vmem:[#allocation8 + $0x128] sm:$0xff]
    %v865 = vld [vmem:[#allocation8 + $0x130] sm:$0xff]
    %v866 = vld [vmem:[#allocation8 + $0x138] sm:$0xff]
    %v867 = vld [vmem:[#allocation8 + $0x140] sm:$0xff]
    %v868 = vld [vmem:[#allocation8 + $0x148] sm:$0xff]
    %v869 = vld [vmem:[#allocation8 + $0x150] sm:$0xff]
    %v870 = vld [vmem:[#allocation8 + $0x158] sm:$0xff]
    %v871 = vld [vmem:[#allocation8 + $0x160] sm:$0xff]
    %v872 = vld [vmem:[#allocation8 + $0x168] sm:$0xff]
    %v873 = vld [vmem:[#allocation8 + $0x170] sm:$0xff]
    %v874 = vld [vmem:[#allocation8 + $0x178] sm:$0xff]
    %875 = vmatprep.subr.mxu0 %v828
    %876 = vmatpush1.msra.mxu0 %v827
    %877 = vmatprep.subr.mxu0 %v831
    %878 = vmatpush1.msra.mxu0 %v830
    %879 = vmatprep.subr.mxu0 %v834
    %880 = vmatpush1.msra.mxu0 %v833
    %881 = vmatprep.subr.mxu0 %v837
    %882 = vmatpush1.msra.mxu0 %v836
    %883 = vmatprep.subr.mxu0 %v840
    %884 = vmatpush1.msra.mxu0 %v839
    %885 = vmatprep.subr.mxu0 %v843
    %886 = vmatpush1.msra.mxu0 %v842
    %887 = vmatprep.subr.mxu0 %v846
    %888 = vmatpush1.msra.mxu0 %v845
    %889 = vmatprep.subr.mxu0 %v849
    %890 = vmatpush1.msra.mxu0 %v848
    %891 = vmatprep.subr.mxu0 %v852
    %892 = vmatpush1.msra.mxu0 %v851
    %893 = vmatprep.subr.mxu0 %v855
    %894 = vmatpush1.msra.mxu0 %v854
    %895 = vmatprep.subr.mxu0 %v858
    %896 = vmatpush1.msra.mxu0 %v857
    %897 = vmatprep.subr.mxu0 %v861
    %898 = vmatpush1.msra.mxu0 %v860
    %899 = vmatprep.subr.mxu0 %v864
    %900 = vmatpush1.msra.mxu0 %v863
    %901 = vmatprep.subr.mxu0 %v867
    %902 = vmatpush1.msra.mxu0 %v866
    %903 = vmatprep.subr.mxu0 %v870
    %904 = vmatpush1.msra.mxu0 %v869
    %905 = vmatprep.subr.mxu0 %v873
    %906 = vmatpush1.msra.mxu0 %v872
    %907 = vmatprep.subr.mxu0 0.0
    %908 = vmatpush1.msra.mxu0 0.0
    %909 = vmatprep.subr.mxu0 0.0
    %910 = vmatpush1.msra.mxu0 0.0
    %911 = vmatprep.subr.mxu0 0.0
    %912 = vmatpush1.msra.mxu0 0.0
    %913 = vmatprep.subr.mxu0 0.0
    %914 = vmatpush1.msra.mxu0 0.0
    %915 = vmatprep.subr.mxu0 0.0
    %916 = vmatpush1.msra.mxu0 0.0
    %917 = vmatprep.subr.mxu0 0.0
    %918 = vmatpush1.msra.mxu0 0.0
    %919 = vmatprep.subr.mxu0 0.0
    %920 = vmatpush1.msra.mxu0 0.0
    %921 = vmatprep.subr.mxu0 0.0
    %922 = vmatpush1.msra.mxu0 0.0
    %923 = vmatprep.subr.mxu0 0.0
    %924 = vmatpush1.msra.mxu0 0.0
    %925 = vmatprep.subr.mxu0 0.0
    %926 = vmatpush1.msra.mxu0 0.0
    %927 = vmatprep.subr.mxu0 0.0
    %928 = vmatpush1.msra.mxu0 0.0
    %929 = vmatprep.subr.mxu0 0.0
    %930 = vmatpush1.msra.mxu0 0.0
    %931 = vmatprep.subr.mxu0 0.0
    %932 = vmatpush1.msra.mxu0 0.0
    %933 = vmatprep.subr.mxu0 0.0
    %934 = vmatpush1.msra.mxu0 0.0
    %935 = vmatprep.subr.mxu0 0.0
    %936 = vmatpush1.msra.mxu0 0.0
    %937 = vmatprep.subr.mxu0 0.0
    %938 = vmatpush1.msra.mxu0 0.0
    %939 = vmatprep.mubr.f32.mxu0 0.0
    %940 = vmatmul.mubr.f32.gmra.mrb[0].mxu0 %v820
    %v941 = vpop.f32.mrb[0].mxu0
    %v942 = vadd.f32 0.0, %v941
    %v943 = vpop.f32.mrb[0].mxu0
    %v944 = vadd.f32 0.0, %v943
    %945 = vdwg.mxu0
    %946 = vmatprep.subr.mxu0 0.0
    %947 = vmatpush1.msra.mxu0 %v829
    %948 = vmatprep.subr.mxu0 0.0
    %949 = vmatpush1.msra.mxu0 %v832
    %950 = vmatprep.subr.mxu0 0.0
    %951 = vmatpush1.msra.mxu0 %v835
    %952 = vmatprep.subr.mxu0 0.0
    %953 = vmatpush1.msra.mxu0 %v838
    %954 = vmatprep.subr.mxu0 0.0
    %955 = vmatpush1.msra.mxu0 %v841
    %956 = vmatprep.subr.mxu0 0.0
    %957 = vmatpush1.msra.mxu0 %v844
    %958 = vmatprep.subr.mxu0 0.0
    %959 = vmatpush1.msra.mxu0 %v847
    %960 = vmatprep.subr.mxu0 0.0
    %961 = vmatpush1.msra.mxu0 %v850
    %962 = vmatprep.subr.mxu0 0.0
    %963 = vmatpush1.msra.mxu0 %v853
    %964 = vmatprep.subr.mxu0 0.0
    %965 = vmatpush1.msra.mxu0 %v856
    %966 = vmatprep.subr.mxu0 0.0
    %967 = vmatpush1.msra.mxu0 %v859
    %968 = vmatprep.subr.mxu0 0.0
    %969 = vmatpush1.msra.mxu0 %v862
    %970 = vmatprep.subr.mxu0 0.0
    %971 = vmatpush1.msra.mxu0 %v865
    %972 = vmatprep.subr.mxu0 0.0
    %973 = vmatpush1.msra.mxu0 %v868
    %974 = vmatprep.subr.mxu0 0.0
    %975 = vmatpush1.msra.mxu0 %v871
    %976 = vmatprep.subr.mxu0 0.0
    %977 = vmatpush1.msra.mxu0 %v874
    %978 = vmatprep.subr.mxu0 0.0
    %979 = vmatpush1.msra.mxu0 0.0
    %980 = vmatprep.subr.mxu0 0.0
    %981 = vmatpush1.msra.mxu0 0.0
    %982 = vmatprep.subr.mxu0 0.0
    %983 = vmatpush1.msra.mxu0 0.0
    %984 = vmatprep.subr.mxu0 0.0
    %985 = vmatpush1.msra.mxu0 0.0
    %986 = vmatprep.subr.mxu0 0.0
    %987 = vmatpush1.msra.mxu0 0.0
    %988 = vmatprep.subr.mxu0 0.0
    %989 = vmatpush1.msra.mxu0 0.0
    %990 = vmatprep.subr.mxu0 0.0
    %991 = vmatpush1.msra.mxu0 0.0
    %992 = vmatprep.subr.mxu0 0.0
    %993 = vmatpush1.msra.mxu0 0.0
    %994 = vmatprep.subr.mxu0 0.0
    %995 = vmatpush1.msra.mxu0 0.0
    %996 = vmatprep.subr.mxu0 0.0
    %997 = vmatpush1.msra.mxu0 0.0
    %998 = vmatprep.subr.mxu0 0.0
    %999 = vmatpush1.msra.mxu0 0.0
    %1000 = vmatprep.subr.mxu0 0.0
    %1001 = vmatpush1.msra.mxu0 0.0
    %1002 = vmatprep.subr.mxu0 0.0
    %1003 = vmatpush1.msra.mxu0 0.0
    %1004 = vmatprep.subr.mxu0 0.0
    %1005 = vmatpush1.msra.mxu0 0.0
    %1006 = vmatprep.subr.mxu0 0.0
    %1007 = vmatpush1.msra.mxu0 0.0
    %1008 = vmatprep.subr.mxu0 0.0
    %1009 = vmatpush1.msra.mxu0 0.0
    %1010 = vmatprep.mubr.f32.mxu0 0.0
    %1011 = vmatmul.mubr.f32.gmra.mrb[0].mxu0 %v820
    %v1012 = vpop.f32.mrb[0].mxu0
    %v1013 = vadd.f32 0.0, %v1012
    %v1014 = vpop.f32.mrb[0].mxu0
    %1015 = vdwg.mxu0
    %v1016 = vadd.f32 %v824, %v942
    %v1017 = vxor.u32 %v1016, 2147483648
    %v1018 = vmul.f32 %v1017, 1.442695
    %v1019 = vpow.pop %v1018
    %v1020 = vadd.f32 %v1019, 1.0
    %v1021 = vrcp.pop %v1020
    %v1022 = vmul.f32 1.0, %v1021
    %v1023 = vadd.f32 %v825, %v944
    %v1024 = vxor.u32 %v1023, 2147483648
    %v1025 = vmul.f32 %v1024, 1.442695
    %v1026 = vpow.pop %v1025
    %v1027 = vadd.f32 %v1026, 1.0
    %v1028 = vrcp.pop %v1027
    %v1029 = vmul.f32 1.0, %v1028
    %v1030 = vld [vmem:[%s4] sm:$0x1]
    %v1032 = vlaneseq
    %v1033 = vshrl.u32 %v1032, 7
    %v1034 = vsub.s32 0, %v1033
    %v1035 = vrot.slane %v1030, %v1034
    %v1037 = vadd.f32 %v1013, %v1035
    %v1038 = vmul.f32 %v1022, %v1037
    %v1039 = vadd.f32 %v826, %v1038
    %v1040 = vtanh.pop %v1039
    %v1041 = vsub.f32 1.0, %v1029
    %v1042 = vmul.f32 %v1041, %v1040
    %v1043 = vmul.f32 %v1029, %v820
    %v1044 = vadd.f32 %v1042, %v1043
    %s1045 = scalar_lea.vmem [#allocation9], 16
    %1046 = vst [vmem:[%s1045] sm:$0xff] %v1044
    %s1047 = scalar_lea.vmem [#allocation2], 72
    %v1048 = vld [vmem:[%s1047] sm:$0xff]
    %v1049 = vld [vmem:[%s1047 + $0x8] sm:$0xff]
    %v1050 = vld [vmem:[%s1047 + $0x10] sm:$0xff]
    %v1051 = vld [vmem:[#allocation8] sm:$0xff]
    %v1052 = vld [vmem:[#allocation8 + $0x8] sm:$0xff]
    %v1053 = vld [vmem:[#allocation8 + $0x10] sm:$0xff]
    %v1054 = vld [vmem:[#allocation8 + $0x18] sm:$0xff]
    %v1055 = vld [vmem:[#allocation8 + $0x20] sm:$0xff]
    %v1056 = vld [vmem:[#allocation8 + $0x28] sm:$0xff]
    %v1057 = vld [vmem:[#allocation8 + $0x30] sm:$0xff]
    %v1058 = vld [vmem:[#allocation8 + $0x38] sm:$0xff]
    %v1059 = vld [vmem:[#allocation8 + $0x40] sm:$0xff]
    %v1060 = vld [vmem:[#allocation8 + $0x48] sm:$0xff]
    %v1061 = vld [vmem:[#allocation8 + $0x50] sm:$0xff]
    %v1062 = vld [vmem:[#allocation8 + $0x58] sm:$0xff]
    %v1063 = vld [vmem:[#allocation8 + $0x60] sm:$0xff]
    %v1064 = vld [vmem:[#allocation8 + $0x68] sm:$0xff]
    %v1065 = vld [vmem:[#allocation8 + $0x70] sm:$0xff]
    %v1066 = vld [vmem:[#allocation8 + $0x78] sm:$0xff]
    %v1067 = vld [vmem:[#allocation8 + $0x80] sm:$0xff]
    %v1068 = vld [vmem:[#allocation8 + $0x88] sm:$0xff]
    %v1069 = vld [vmem:[#allocation8 + $0x90] sm:$0xff]
    %v1070 = vld [vmem:[#allocation8 + $0x98] sm:$0xff]
    %v1071 = vld [vmem:[#allocation8 + $0xa0] sm:$0xff]
    %v1072 = vld [vmem:[#allocation8 + $0xa8] sm:$0xff]
    %v1073 = vld [vmem:[#allocation8 + $0xb0] sm:$0xff]
    %v1074 = vld [vmem:[#allocation8 + $0xb8] sm:$0xff]
    %v1075 = vld [vmem:[#allocation8 + $0xc0] sm:$0xff]
    %v1076 = vld [vmem:[#allocation8 + $0xc8] sm:$0xff]
    %v1077 = vld [vmem:[#allocation8 + $0xd0] sm:$0xff]
    %v1078 = vld [vmem:[#allocation8 + $0xd8] sm:$0xff]
    %v1079 = vld [vmem:[#allocation8 + $0xe0] sm:$0xff]
    %v1080 = vld [vmem:[#allocation8 + $0xe8] sm:$0xff]
    %v1081 = vld [vmem:[#allocation8 + $0xf0] sm:$0xff]
    %v1082 = vld [vmem:[#allocation8 + $0xf8] sm:$0xff]
    %v1083 = vld [vmem:[#allocation8 + $0x100] sm:$0xff]
    %v1084 = vld [vmem:[#allocation8 + $0x108] sm:$0xff]
    %v1085 = vld [vmem:[#allocation8 + $0x110] sm:$0xff]
    %v1086 = vld [vmem:[#allocation8 + $0x118] sm:$0xff]
    %v1087 = vld [vmem:[#allocation8 + $0x120] sm:$0xff]
    %v1088 = vld [vmem:[#allocation8 + $0x128] sm:$0xff]
    %v1089 = vld [vmem:[#allocation8 + $0x130] sm:$0xff]
    %v1090 = vld [vmem:[#allocation8 + $0x138] sm:$0xff]
    %v1091 = vld [vmem:[#allocation8 + $0x140] sm:$0xff]
    %v1092 = vld [vmem:[#allocation8 + $0x148] sm:$0xff]
    %v1093 = vld [vmem:[#allocation8 + $0x150] sm:$0xff]
    %v1094 = vld [vmem:[#allocation8 + $0x158] sm:$0xff]
    %v1095 = vld [vmem:[#allocation8 + $0x160] sm:$0xff]
    %v1096 = vld [vmem:[#allocation8 + $0x168] sm:$0xff]
    %v1097 = vld [vmem:[#allocation8 + $0x170] sm:$0xff]
    %v1098 = vld [vmem:[#allocation8 + $0x178] sm:$0xff]
    %1099 = vmatprep.subr.mxu0 %v1052
    %1100 = vmatpush1.msra.mxu0 %v1051
    %1101 = vmatprep.subr.mxu0 %v1055
    %1102 = vmatpush1.msra.mxu0 %v1054
    %1103 = vmatprep.subr.mxu0 %v1058
    %1104 = vmatpush1.msra.mxu0 %v1057
    %1105 = vmatprep.subr.mxu0 %v1061
    %1106 = vmatpush1.msra.mxu0 %v1060
    %1107 = vmatprep.subr.mxu0 %v1064
    %1108 = vmatpush1.msra.mxu0 %v1063
    %1109 = vmatprep.subr.mxu0 %v1067
    %1110 = vmatpush1.msra.mxu0 %v1066
    %1111 = vmatprep.subr.mxu0 %v1070
    %1112 = vmatpush1.msra.mxu0 %v1069
    %1113 = vmatprep.subr.mxu0 %v1073
    %1114 = vmatpush1.msra.mxu0 %v1072
    %1115 = vmatprep.subr.mxu0 %v1076
    %1116 = vmatpush1.msra.mxu0 %v1075
    %1117 = vmatprep.subr.mxu0 %v1079
    %1118 = vmatpush1.msra.mxu0 %v1078
    %1119 = vmatprep.subr.mxu0 %v1082
    %1120 = vmatpush1.msra.mxu0 %v1081
    %1121 = vmatprep.subr.mxu0 %v1085
    %1122 = vmatpush1.msra.mxu0 %v1084
    %1123 = vmatprep.subr.mxu0 %v1088
    %1124 = vmatpush1.msra.mxu0 %v1087
    %1125 = vmatprep.subr.mxu0 %v1091
    %1126 = vmatpush1.msra.mxu0 %v1090
    %1127 = vmatprep.subr.mxu0 %v1094
    %1128 = vmatpush1.msra.mxu0 %v1093
    %1129 = vmatprep.subr.mxu0 %v1097
    %1130 = vmatpush1.msra.mxu0 %v1096
    %1131 = vmatprep.subr.mxu0 0.0
    %1132 = vmatpush1.msra.mxu0 0.0
    %1133 = vmatprep.subr.mxu0 0.0
    %1134 = vmatpush1.msra.mxu0 0.0
    %1135 = vmatprep.subr.mxu0 0.0
    %1136 = vmatpush1.msra.mxu0 0.0
    %1137 = vmatprep.subr.mxu0 0.0
    %1138 = vmatpush1.msra.mxu0 0.0
    %1139 = vmatprep.subr.mxu0 0.0
    %1140 = vmatpush1.msra.mxu0 0.0
    %1141 = vmatprep.subr.mxu0 0.0
    %1142 = vmatpush1.msra.mxu0 0.0
    %1143 = vmatprep.subr.mxu0 0.0
    %1144 = vmatpush1.msra.mxu0 0.0
    %1145 = vmatprep.subr.mxu0 0.0
    %1146 = vmatpush1.msra.mxu0 0.0
    %1147 = vmatprep.subr.mxu0 0.0
    %1148 = vmatpush1.msra.mxu0 0.0
    %1149 = vmatprep.subr.mxu0 0.0
    %1150 = vmatpush1.msra.mxu0 0.0
    %1151 = vmatprep.subr.mxu0 0.0
    %1152 = vmatpush1.msra.mxu0 0.0
    %1153 = vmatprep.subr.mxu0 0.0
    %1154 = vmatpush1.msra.mxu0 0.0
    %1155 = vmatprep.subr.mxu0 0.0
    %1156 = vmatpush1.msra.mxu0 0.0
    %1157 = vmatprep.subr.mxu0 0.0
    %1158 = vmatpush1.msra.mxu0 0.0
    %1159 = vmatprep.subr.mxu0 0.0
    %1160 = vmatpush1.msra.mxu0 0.0
    %1161 = vmatprep.subr.mxu0 0.0
    %1162 = vmatpush1.msra.mxu0 0.0
    %1163 = vmatprep.mubr.f32.mxu0 0.0
    %1164 = vmatmul.mubr.f32.gmra.mrb[0].mxu0 %v1044
    %v1165 = vpop.f32.mrb[0].mxu0
    %v1166 = vadd.f32 0.0, %v1165
    %v1167 = vpop.f32.mrb[0].mxu0
    %v1168 = vadd.f32 0.0, %v1167
    %1169 = vdwg.mxu0
    %1170 = vmatprep.subr.mxu0 0.0
    %1171 = vmatpush1.msra.mxu0 %v1053
    %1172 = vmatprep.subr.mxu0 0.0
    %1173 = vmatpush1.msra.mxu0 %v1056
    %1174 = vmatprep.subr.mxu0 0.0
    %1175 = vmatpush1.msra.mxu0 %v1059
    %1176 = vmatprep.subr.mxu0 0.0
    %1177 = vmatpush1.msra.mxu0 %v1062
    %1178 = vmatprep.subr.mxu0 0.0
    %1179 = vmatpush1.msra.mxu0 %v1065
    %1180 = vmatprep.subr.mxu0 0.0
    %1181 = vmatpush1.msra.mxu0 %v1068
    %1182 = vmatprep.subr.mxu0 0.0
    %1183 = vmatpush1.msra.mxu0 %v1071
    %1184 = vmatprep.subr.mxu0 0.0
    %1185 = vmatpush1.msra.mxu0 %v1074
    %1186 = vmatprep.subr.mxu0 0.0
    %1187 = vmatpush1.msra.mxu0 %v1077
    %1188 = vmatprep.subr.mxu0 0.0
    %1189 = vmatpush1.msra.mxu0 %v1080
    %1190 = vmatprep.subr.mxu0 0.0
    %1191 = vmatpush1.msra.mxu0 %v1083
    %1192 = vmatprep.subr.mxu0 0.0
    %1193 = vmatpush1.msra.mxu0 %v1086
    %1194 = vmatprep.subr.mxu0 0.0
    %1195 = vmatpush1.msra.mxu0 %v1089
    %1196 = vmatprep.subr.mxu0 0.0
    %1197 = vmatpush1.msra.mxu0 %v1092
    %1198 = vmatprep.subr.mxu0 0.0
    %1199 = vmatpush1.msra.mxu0 %v1095
    %1200 = vmatprep.subr.mxu0 0.0
    %1201 = vmatpush1.msra.mxu0 %v1098
    %1202 = vmatprep.subr.mxu0 0.0
    %1203 = vmatpush1.msra.mxu0 0.0
    %1204 = vmatprep.subr.mxu0 0.0
    %1205 = vmatpush1.msra.mxu0 0.0
    %1206 = vmatprep.subr.mxu0 0.0
    %1207 = vmatpush1.msra.mxu0 0.0
    %1208 = vmatprep.subr.mxu0 0.0
    %1209 = vmatpush1.msra.mxu0 0.0
    %1210 = vmatprep.subr.mxu0 0.0
    %1211 = vmatpush1.msra.mxu0 0.0
    %1212 = vmatprep.subr.mxu0 0.0
    %1213 = vmatpush1.msra.mxu0 0.0
    %1214 = vmatprep.subr.mxu0 0.0
    %1215 = vmatpush1.msra.mxu0 0.0
    %1216 = vmatprep.subr.mxu0 0.0
    %1217 = vmatpush1.msra.mxu0 0.0
    %1218 = vmatprep.subr.mxu0 0.0
    %1219 = vmatpush1.msra.mxu0 0.0
    %1220 = vmatprep.subr.mxu0 0.0
    %1221 = vmatpush1.msra.mxu0 0.0
    %1222 = vmatprep.subr.mxu0 0.0
    %1223 = vmatpush1.msra.mxu0 0.0
    %1224 = vmatprep.subr.mxu0 0.0
    %1225 = vmatpush1.msra.mxu0 0.0
    %1226 = vmatprep.subr.mxu0 0.0
    %1227 = vmatpush1.msra.mxu0 0.0
    %1228 = vmatprep.subr.mxu0 0.0
    %1229 = vmatpush1.msra.mxu0 0.0
    %1230 = vmatprep.subr.mxu0 0.0
    %1231 = vmatpush1.msra.mxu0 0.0
    %1232 = vmatprep.subr.mxu0 0.0
    %1233 = vmatpush1.msra.mxu0 0.0
    %1234 = vmatprep.mubr.f32.mxu0 0.0
    %1235 = vmatmul.mubr.f32.gmra.mrb[0].mxu0 %v1044
    %v1236 = vpop.f32.mrb[0].mxu0
    %v1237 = vadd.f32 0.0, %v1236
    %v1238 = vpop.f32.mrb[0].mxu0
    %1239 = vdwg.mxu0
    %v1240 = vadd.f32 %v1048, %v1166
    %v1241 = vxor.u32 %v1240, 2147483648
    %v1242 = vmul.f32 %v1241, 1.442695
    %v1243 = vpow.pop %v1242
    %v1244 = vadd.f32 %v1243, 1.0
    %v1245 = vrcp.pop %v1244
    %v1246 = vmul.f32 1.0, %v1245
    %v1247 = vadd.f32 %v1049, %v1168
    %v1248 = vxor.u32 %v1247, 2147483648
    %v1249 = vmul.f32 %v1248, 1.442695
    %v1250 = vpow.pop %v1249
    %v1251 = vadd.f32 %v1250, 1.0
    %v1252 = vrcp.pop %v1251
    %v1253 = vmul.f32 1.0, %v1252
    %v1254 = vld [vmem:[%s4] sm:$0x1]
    %v1256 = vlaneseq
    %v1257 = vshrl.u32 %v1256, 7
    %v1258 = vsub.s32 0, %v1257
    %v1259 = vrot.slane %v1254, %v1258
    %v1261 = vadd.f32 %v1237, %v1259
    %v1262 = vmul.f32 %v1246, %v1261
    %v1263 = vadd.f32 %v1050, %v1262
    %v1264 = vtanh.pop %v1263
    %v1265 = vsub.f32 1.0, %v1253
    %v1266 = vmul.f32 %v1265, %v1264
    %v1267 = vmul.f32 %v1253, %v1044
    %v1268 = vadd.f32 %v1266, %v1267
    %s1269 = scalar_lea.vmem [#allocation9], 24
    %1270 = vst [vmem:[%s1269] sm:$0xff] %v1268
    %s1271 = scalar_lea.vmem [#allocation2], 96
    %v1272 = vld [vmem:[%s1271] sm:$0xff]
    %v1273 = vld [vmem:[%s1271 + $0x8] sm:$0xff]
    %v1274 = vld [vmem:[%s1271 + $0x10] sm:$0xff]
    %v1275 = vld [vmem:[#allocation8] sm:$0xff]
    %v1276 = vld [vmem:[#allocation8 + $0x8] sm:$0xff]
    %v1277 = vld [vmem:[#allocation8 + $0x10] sm:$0xff]
    %v1278 = vld [vmem:[#allocation8 + $0x18] sm:$0xff]
    %v1279 = vld [vmem:[#allocation8 + $0x20] sm:$0xff]
    %v1280 = vld [vmem:[#allocation8 + $0x28] sm:$0xff]
    %v1281 = vld [vmem:[#allocation8 + $0x30] sm:$0xff]
    %v1282 = vld [vmem:[#allocation8 + $0x38] sm:$0xff]
    %v1283 = vld [vmem:[#allocation8 + $0x40] sm:$0xff]
    %v1284 = vld [vmem:[#allocation8 + $0x48] sm:$0xff]
    %v1285 = vld [vmem:[#allocation8 + $0x50] sm:$0xff]
    %v1286 = vld [vmem:[#allocation8 + $0x58] sm:$0xff]
    %v1287 = vld [vmem:[#allocation8 + $0x60] sm:$0xff]
    %v1288 = vld [vmem:[#allocation8 + $0x68] sm:$0xff]
    %v1289 = vld [vmem:[#allocation8 + $0x70] sm:$0xff]
    %v1290 = vld [vmem:[#allocation8 + $0x78] sm:$0xff]
    %v1291 = vld [vmem:[#allocation8 + $0x80] sm:$0xff]
    %v1292 = vld [vmem:[#allocation8 + $0x88] sm:$0xff]
    %v1293 = vld [vmem:[#allocation8 + $0x90] sm:$0xff]
    %v1294 = vld [vmem:[#allocation8 + $0x98] sm:$0xff]
    %v1295 = vld [vmem:[#allocation8 + $0xa0] sm:$0xff]
    %v1296 = vld [vmem:[#allocation8 + $0xa8] sm:$0xff]
    %v1297 = vld [vmem:[#allocation8 + $0xb0] sm:$0xff]
    %v1298 = vld [vmem:[#allocation8 + $0xb8] sm:$0xff]
    %v1299 = vld [vmem:[#allocation8 + $0xc0] sm:$0xff]
    %v1300 = vld [vmem:[#allocation8 + $0xc8] sm:$0xff]
    %v1301 = vld [vmem:[#allocation8 + $0xd0] sm:$0xff]
    %v1302 = vld [vmem:[#allocation8 + $0xd8] sm:$0xff]
    %v1303 = vld [vmem:[#allocation8 + $0xe0] sm:$0xff]
    %v1304 = vld [vmem:[#allocation8 + $0xe8] sm:$0xff]
    %v1305 = vld [vmem:[#allocation8 + $0xf0] sm:$0xff]
    %v1306 = vld [vmem:[#allocation8 + $0xf8] sm:$0xff]
    %v1307 = vld [vmem:[#allocation8 + $0x100] sm:$0xff]
    %v1308 = vld [vmem:[#allocation8 + $0x108] sm:$0xff]
    %v1309 = vld [vmem:[#allocation8 + $0x110] sm:$0xff]
    %v1310 = vld [vmem:[#allocation8 + $0x118] sm:$0xff]
    %v1311 = vld [vmem:[#allocation8 + $0x120] sm:$0xff]
    %v1312 = vld [vmem:[#allocation8 + $0x128] sm:$0xff]
    %v1313 = vld [vmem:[#allocation8 + $0x130] sm:$0xff]
    %v1314 = vld [vmem:[#allocation8 + $0x138] sm:$0xff]
    %v1315 = vld [vmem:[#allocation8 + $0x140] sm:$0xff]
    %v1316 = vld [vmem:[#allocation8 + $0x148] sm:$0xff]
    %v1317 = vld [vmem:[#allocation8 + $0x150] sm:$0xff]
    %v1318 = vld [vmem:[#allocation8 + $0x158] sm:$0xff]
    %v1319 = vld [vmem:[#allocation8 + $0x160] sm:$0xff]
    %v1320 = vld [vmem:[#allocation8 + $0x168] sm:$0xff]
    %v1321 = vld [vmem:[#allocation8 + $0x170] sm:$0xff]
    %v1322 = vld [vmem:[#allocation8 + $0x178] sm:$0xff]
    %1323 = vmatprep.subr.mxu0 %v1276
    %1324 = vmatpush1.msra.mxu0 %v1275
    %1325 = vmatprep.subr.mxu0 %v1279
    %1326 = vmatpush1.msra.mxu0 %v1278
    %1327 = vmatprep.subr.mxu0 %v1282
    %1328 = vmatpush1.msra.mxu0 %v1281
    %1329 = vmatprep.subr.mxu0 %v1285
    %1330 = vmatpush1.msra.mxu0 %v1284
    %1331 = vmatprep.subr.mxu0 %v1288
    %1332 = vmatpush1.msra.mxu0 %v1287
    %1333 = vmatprep.subr.mxu0 %v1291
    %1334 = vmatpush1.msra.mxu0 %v1290
    %1335 = vmatprep.subr.mxu0 %v1294
    %1336 = vmatpush1.msra.mxu0 %v1293
    %1337 = vmatprep.subr.mxu0 %v1297
    %1338 = vmatpush1.msra.mxu0 %v1296
    %1339 = vmatprep.subr.mxu0 %v1300
    %1340 = vmatpush1.msra.mxu0 %v1299
    %1341 = vmatprep.subr.mxu0 %v1303
    %1342 = vmatpush1.msra.mxu0 %v1302
    %1343 = vmatprep.subr.mxu0 %v1306
    %1344 = vmatpush1.msra.mxu0 %v1305
    %1345 = vmatprep.subr.mxu0 %v1309
    %1346 = vmatpush1.msra.mxu0 %v1308
    %1347 = vmatprep.subr.mxu0 %v1312
    %1348 = vmatpush1.msra.mxu0 %v1311
    %1349 = vmatprep.subr.mxu0 %v1315
    %1350 = vmatpush1.msra.mxu0 %v1314
    %1351 = vmatprep.subr.mxu0 %v1318
    %1352 = vmatpush1.msra.mxu0 %v1317
    %1353 = vmatprep.subr.mxu0 %v1321
    %1354 = vmatpush1.msra.mxu0 %v1320
    %1355 = vmatprep.subr.mxu0 0.0
    %1356 = vmatpush1.msra.mxu0 0.0
    %1357 = vmatprep.subr.mxu0 0.0
    %1358 = vmatpush1.msra.mxu0 0.0
    %1359 = vmatprep.subr.mxu0 0.0
    %1360 = vmatpush1.msra.mxu0 0.0
    %1361 = vmatprep.subr.mxu0 0.0
    %1362 = vmatpush1.msra.mxu0 0.0
    %1363 = vmatprep.subr.mxu0 0.0
    %1364 = vmatpush1.msra.mxu0 0.0
    %1365 = vmatprep.subr.mxu0 0.0
    %1366 = vmatpush1.msra.mxu0 0.0
    %1367 = vmatprep.subr.mxu0 0.0
    %1368 = vmatpush1.msra.mxu0 0.0
    %1369 = vmatprep.subr.mxu0 0.0
    %1370 = vmatpush1.msra.mxu0 0.0
    %1371 = vmatprep.subr.mxu0 0.0
    %1372 = vmatpush1.msra.mxu0 0.0
    %1373 = vmatprep.subr.mxu0 0.0
    %1374 = vmatpush1.msra.mxu0 0.0
    %1375 = vmatprep.subr.mxu0 0.0
    %1376 = vmatpush1.msra.mxu0 0.0
    %1377 = vmatprep.subr.mxu0 0.0
    %1378 = vmatpush1.msra.mxu0 0.0
    %1379 = vmatprep.subr.mxu0 0.0
    %1380 = vmatpush1.msra.mxu0 0.0
    %1381 = vmatprep.subr.mxu0 0.0
    %1382 = vmatpush1.msra.mxu0 0.0
    %1383 = vmatprep.subr.mxu0 0.0
    %1384 = vmatpush1.msra.mxu0 0.0
    %1385 = vmatprep.subr.mxu0 0.0
    %1386 = vmatpush1.msra.mxu0 0.0
    %1387 = vmatprep.mubr.f32.mxu0 0.0
    %1388 = vmatmul.mubr.f32.gmra.mrb[0].mxu0 %v1268
    %v1389 = vpop.f32.mrb[0].mxu0
    %v1390 = vadd.f32 0.0, %v1389
    %v1391 = vpop.f32.mrb[0].mxu0
    %v1392 = vadd.f32 0.0, %v1391
    %1393 = vdwg.mxu0
    %1394 = vmatprep.subr.mxu0 0.0
    %1395 = vmatpush1.msra.mxu0 %v1277
    %1396 = vmatprep.subr.mxu0 0.0
    %1397 = vmatpush1.msra.mxu0 %v1280
    %1398 = vmatprep.subr.mxu0 0.0
    %1399 = vmatpush1.msra.mxu0 %v1283
    %1400 = vmatprep.subr.mxu0 0.0
    %1401 = vmatpush1.msra.mxu0 %v1286
    %1402 = vmatprep.subr.mxu0 0.0
    %1403 = vmatpush1.msra.mxu0 %v1289
    %1404 = vmatprep.subr.mxu0 0.0
    %1405 = vmatpush1.msra.mxu0 %v1292
    %1406 = vmatprep.subr.mxu0 0.0
    %1407 = vmatpush1.msra.mxu0 %v1295
    %1408 = vmatprep.subr.mxu0 0.0
    %1409 = vmatpush1.msra.mxu0 %v1298
    %1410 = vmatprep.subr.mxu0 0.0
    %1411 = vmatpush1.msra.mxu0 %v1301
    %1412 = vmatprep.subr.mxu0 0.0
    %1413 = vmatpush1.msra.mxu0 %v1304
    %1414 = vmatprep.subr.mxu0 0.0
    %1415 = vmatpush1.msra.mxu0 %v1307
    %1416 = vmatprep.subr.mxu0 0.0
    %1417 = vmatpush1.msra.mxu0 %v1310
    %1418 = vmatprep.subr.mxu0 0.0
    %1419 = vmatpush1.msra.mxu0 %v1313
    %1420 = vmatprep.subr.mxu0 0.0
    %1421 = vmatpush1.msra.mxu0 %v1316
    %1422 = vmatprep.subr.mxu0 0.0
    %1423 = vmatpush1.msra.mxu0 %v1319
    %1424 = vmatprep.subr.mxu0 0.0
    %1425 = vmatpush1.msra.mxu0 %v1322
    %1426 = vmatprep.subr.mxu0 0.0
    %1427 = vmatpush1.msra.mxu0 0.0
    %1428 = vmatprep.subr.mxu0 0.0
    %1429 = vmatpush1.msra.mxu0 0.0
    %1430 = vmatprep.subr.mxu0 0.0
    %1431 = vmatpush1.msra.mxu0 0.0
    %1432 = vmatprep.subr.mxu0 0.0
    %1433 = vmatpush1.msra.mxu0 0.0
    %1434 = vmatprep.subr.mxu0 0.0
    %1435 = vmatpush1.msra.mxu0 0.0
    %1436 = vmatprep.subr.mxu0 0.0
    %1437 = vmatpush1.msra.mxu0 0.0
    %1438 = vmatprep.subr.mxu0 0.0
    %1439 = vmatpush1.msra.mxu0 0.0
    %1440 = vmatprep.subr.mxu0 0.0
    %1441 = vmatpush1.msra.mxu0 0.0
    %1442 = vmatprep.subr.mxu0 0.0
    %1443 = vmatpush1.msra.mxu0 0.0
    %1444 = vmatprep.subr.mxu0 0.0
    %1445 = vmatpush1.msra.mxu0 0.0
    %1446 = vmatprep.subr.mxu0 0.0
    %1447 = vmatpush1.msra.mxu0 0.0
    %1448 = vmatprep.subr.mxu0 0.0
    %1449 = vmatpush1.msra.mxu0 0.0
    %1450 = vmatprep.subr.mxu0 0.0
    %1451 = vmatpush1.msra.mxu0 0.0
    %1452 = vmatprep.subr.mxu0 0.0
    %1453 = vmatpush1.msra.mxu0 0.0
    %1454 = vmatprep.subr.mxu0 0.0
    %1455 = vmatpush1.msra.mxu0 0.0
    %1456 = vmatprep.subr.mxu0 0.0
    %1457 = vmatpush1.msra.mxu0 0.0
    %1458 = vmatprep.mubr.f32.mxu0 0.0
    %1459 = vmatmul.mubr.f32.gmra.mrb[0].mxu0 %v1268
    %v1460 = vpop.f32.mrb[0].mxu0
    %v1461 = vadd.f32 0.0, %v1460
    %v1462 = vpop.f32.mrb[0].mxu0
    %1463 = vdwg.mxu0
    %v1464 = vadd.f32 %v1272, %v1390
    %v1465 = vxor.u32 %v1464, 2147483648
    %v1466 = vmul.f32 %v1465, 1.442695
    %v1467 = vpow.pop %v1466
    %v1468 = vadd.f32 %v1467, 1.0
    %v1469 = vrcp.pop %v1468
    %v1470 = vmul.f32 1.0, %v1469
    %v1471 = vadd.f32 %v1273, %v1392
    %v1472 = vxor.u32 %v1471, 2147483648
    %v1473 = vmul.f32 %v1472, 1.442695
    %v1474 = vpow.pop %v1473
    %v1475 = vadd.f32 %v1474, 1.0
    %v1476 = vrcp.pop %v1475
    %v1477 = vmul.f32 1.0, %v1476
    %v1478 = vld [vmem:[%s4] sm:$0x1]
    %v1480 = vlaneseq
    %v1481 = vshrl.u32 %v1480, 7
    %v1482 = vsub.s32 0, %v1481
    %v1483 = vrot.slane %v1478, %v1482
    %v1485 = vadd.f32 %v1461, %v1483
    %v1486 = vmul.f32 %v1470, %v1485
    %v1487 = vadd.f32 %v1274, %v1486
    %v1488 = vtanh.pop %v1487
    %v1489 = vsub.f32 1.0, %v1477
    %v1490 = vmul.f32 %v1489, %v1488
    %v1491 = vmul.f32 %v1477, %v1268
    %v1492 = vadd.f32 %v1490, %v1491
    %s1493 = scalar_lea.vmem [#allocation9], 32
    %1494 = vst [vmem:[%s1493] sm:$0xff] %v1492
    %s1495 = scalar_lea.vmem [#allocation2], 120
    %v1496 = vld [vmem:[%s1495] sm:$0xff]
    %v1497 = vld [vmem:[%s1495 + $0x8] sm:$0xff]
    %v1498 = vld [vmem:[%s1495 + $0x10] sm:$0xff]
    %v1499 = vld [vmem:[#allocation8] sm:$0xff]
    %v1500 = vld [vmem:[#allocation8 + $0x8] sm:$0xff]
    %v1501 = vld [vmem:[#allocation8 + $0x10] sm:$0xff]
    %v1502 = vld [vmem:[#allocation8 + $0x18] sm:$0xff]
    %v1503 = vld [vmem:[#allocation8 + $0x20] sm:$0xff]
    %v1504 = vld [vmem:[#allocation8 + $0x28] sm:$0xff]
    %v1505 = vld [vmem:[#allocation8 + $0x30] sm:$0xff]
    %v1506 = vld [vmem:[#allocation8 + $0x38] sm:$0xff]
    %v1507 = vld [vmem:[#allocation8 + $0x40] sm:$0xff]
    %v1508 = vld [vmem:[#allocation8 + $0x48] sm:$0xff]
    %v1509 = vld [vmem:[#allocation8 + $0x50] sm:$0xff]
    %v1510 = vld [vmem:[#allocation8 + $0x58] sm:$0xff]
    %v1511 = vld [vmem:[#allocation8 + $0x60] sm:$0xff]
    %v1512 = vld [vmem:[#allocation8 + $0x68] sm:$0xff]
    %v1513 = vld [vmem:[#allocation8 + $0x70] sm:$0xff]
    %v1514 = vld [vmem:[#allocation8 + $0x78] sm:$0xff]
    %v1515 = vld [vmem:[#allocation8 + $0x80] sm:$0xff]
    %v1516 = vld [vmem:[#allocation8 + $0x88] sm:$0xff]
    %v1517 = vld [vmem:[#allocation8 + $0x90] sm:$0xff]
    %v1518 = vld [vmem:[#allocation8 + $0x98] sm:$0xff]
    %v1519 = vld [vmem:[#allocation8 + $0xa0] sm:$0xff]
    %v1520 = vld [vmem:[#allocation8 + $0xa8] sm:$0xff]
    %v1521 = vld [vmem:[#allocation8 + $0xb0] sm:$0xff]
    %v1522 = vld [vmem:[#allocation8 + $0xb8] sm:$0xff]
    %v1523 = vld [vmem:[#allocation8 + $0xc0] sm:$0xff]
    %v1524 = vld [vmem:[#allocation8 + $0xc8] sm:$0xff]
    %v1525 = vld [vmem:[#allocation8 + $0xd0] sm:$0xff]
    %v1526 = vld [vmem:[#allocation8 + $0xd8] sm:$0xff]
    %v1527 = vld [vmem:[#allocation8 + $0xe0] sm:$0xff]
    %v1528 = vld [vmem:[#allocation8 + $0xe8] sm:$0xff]
    %v1529 = vld [vmem:[#allocation8 + $0xf0] sm:$0xff]
    %v1530 = vld [vmem:[#allocation8 + $0xf8] sm:$0xff]
    %v1531 = vld [vmem:[#allocation8 + $0x100] sm:$0xff]
    %v1532 = vld [vmem:[#allocation8 + $0x108] sm:$0xff]
    %v1533 = vld [vmem:[#allocation8 + $0x110] sm:$0xff]
    %v1534 = vld [vmem:[#allocation8 + $0x118] sm:$0xff]
    %v1535 = vld [vmem:[#allocation8 + $0x120] sm:$0xff]
    %v1536 = vld [vmem:[#allocation8 + $0x128] sm:$0xff]
    %v1537 = vld [vmem:[#allocation8 + $0x130] sm:$0xff]
    %v1538 = vld [vmem:[#allocation8 + $0x138] sm:$0xff]
    %v1539 = vld [vmem:[#allocation8 + $0x140] sm:$0xff]
    %v1540 = vld [vmem:[#allocation8 + $0x148] sm:$0xff]
    %v1541 = vld [vmem:[#allocation8 + $0x150] sm:$0xff]
    %v1542 = vld [vmem:[#allocation8 + $0x158] sm:$0xff]
    %v1543 = vld [vmem:[#allocation8 + $0x160] sm:$0xff]
    %v1544 = vld [vmem:[#allocation8 + $0x168] sm:$0xff]
    %v1545 = vld [vmem:[#allocation8 + $0x170] sm:$0xff]
    %v1546 = vld [vmem:[#allocation8 + $0x178] sm:$0xff]
    %1547 = vmatprep.subr.mxu0 %v1500
    %1548 = vmatpush1.msra.mxu0 %v1499
    %1549 = vmatprep.subr.mxu0 %v1503
    %1550 = vmatpush1.msra.mxu0 %v1502
    %1551 = vmatprep.subr.mxu0 %v1506
    %1552 = vmatpush1.msra.mxu0 %v1505
    %1553 = vmatprep.subr.mxu0 %v1509
    %1554 = vmatpush1.msra.mxu0 %v1508
    %1555 = vmatprep.subr.mxu0 %v1512
    %1556 = vmatpush1.msra.mxu0 %v1511
    %1557 = vmatprep.subr.mxu0 %v1515
    %1558 = vmatpush1.msra.mxu0 %v1514
    %1559 = vmatprep.subr.mxu0 %v1518
    %1560 = vmatpush1.msra.mxu0 %v1517
    %1561 = vmatprep.subr.mxu0 %v1521
    %1562 = vmatpush1.msra.mxu0 %v1520
    %1563 = vmatprep.subr.mxu0 %v1524
    %1564 = vmatpush1.msra.mxu0 %v1523
    %1565 = vmatprep.subr.mxu0 %v1527
    %1566 = vmatpush1.msra.mxu0 %v1526
    %1567 = vmatprep.subr.mxu0 %v1530
    %1568 = vmatpush1.msra.mxu0 %v1529
    %1569 = vmatprep.subr.mxu0 %v1533
    %1570 = vmatpush1.msra.mxu0 %v1532
    %1571 = vmatprep.subr.mxu0 %v1536
    %1572 = vmatpush1.msra.mxu0 %v1535
    %1573 = vmatprep.subr.mxu0 %v1539
    %1574 = vmatpush1.msra.mxu0 %v1538
    %1575 = vmatprep.subr.mxu0 %v1542
    %1576 = vmatpush1.msra.mxu0 %v1541
    %1577 = vmatprep.subr.mxu0 %v1545
    %1578 = vmatpush1.msra.mxu0 %v1544
    %1579 = vmatprep.subr.mxu0 0.0
    %1580 = vmatpush1.msra.mxu0 0.0
    %1581 = vmatprep.subr.mxu0 0.0
    %1582 = vmatpush1.msra.mxu0 0.0
    %1583 = vmatprep.subr.mxu0 0.0
    %1584 = vmatpush1.msra.mxu0 0.0
    %1585 = vmatprep.subr.mxu0 0.0
    %1586 = vmatpush1.msra.mxu0 0.0
    %1587 = vmatprep.subr.mxu0 0.0
    %1588 = vmatpush1.msra.mxu0 0.0
    %1589 = vmatprep.subr.mxu0 0.0
    %1590 = vmatpush1.msra.mxu0 0.0
    %1591 = vmatprep.subr.mxu0 0.0
    %1592 = vmatpush1.msra.mxu0 0.0
    %1593 = vmatprep.subr.mxu0 0.0
    %1594 = vmatpush1.msra.mxu0 0.0
    %1595 = vmatprep.subr.mxu0 0.0
    %1596 = vmatpush1.msra.mxu0 0.0
    %1597 = vmatprep.subr.mxu0 0.0
    %1598 = vmatpush1.msra.mxu0 0.0
    %1599 = vmatprep.subr.mxu0 0.0
    %1600 = vmatpush1.msra.mxu0 0.0
    %1601 = vmatprep.subr.mxu0 0.0
    %1602 = vmatpush1.msra.mxu0 0.0
    %1603 = vmatprep.subr.mxu0 0.0
    %1604 = vmatpush1.msra.mxu0 0.0
    %1605 = vmatprep.subr.mxu0 0.0
    %1606 = vmatpush1.msra.mxu0 0.0
    %1607 = vmatprep.subr.mxu0 0.0
    %1608 = vmatpush1.msra.mxu0 0.0
    %1609 = vmatprep.subr.mxu0 0.0
    %1610 = vmatpush1.msra.mxu0 0.0
    %1611 = vmatprep.mubr.f32.mxu0 0.0
    %1612 = vmatmul.mubr.f32.gmra.mrb[0].mxu0 %v1492
    %v1613 = vpop.f32.mrb[0].mxu0
    %v1614 = vadd.f32 0.0, %v1613
    %v1615 = vpop.f32.mrb[0].mxu0
    %v1616 = vadd.f32 0.0, %v1615
    %1617 = vdwg.mxu0
    %1618 = vmatprep.subr.mxu0 0.0
    %1619 = vmatpush1.msra.mxu0 %v1501
    %1620 = vmatprep.subr.mxu0 0.0
    %1621 = vmatpush1.msra.mxu0 %v1504
    %1622 = vmatprep.subr.mxu0 0.0
    %1623 = vmatpush1.msra.mxu0 %v1507
    %1624 = vmatprep.subr.mxu0 0.0
    %1625 = vmatpush1.msra.mxu0 %v1510
    %1626 = vmatprep.subr.mxu0 0.0
    %1627 = vmatpush1.msra.mxu0 %v1513
    %1628 = vmatprep.subr.mxu0 0.0
    %1629 = vmatpush1.msra.mxu0 %v1516
    %1630 = vmatprep.subr.mxu0 0.0
    %1631 = vmatpush1.msra.mxu0 %v1519
    %1632 = vmatprep.subr.mxu0 0.0
    %1633 = vmatpush1.msra.mxu0 %v1522
    %1634 = vmatprep.subr.mxu0 0.0
    %1635 = vmatpush1.msra.mxu0 %v1525
    %1636 = vmatprep.subr.mxu0 0.0
    %1637 = vmatpush1.msra.mxu0 %v1528
    %1638 = vmatprep.subr.mxu0 0.0
    %1639 = vmatpush1.msra.mxu0 %v1531
    %1640 = vmatprep.subr.mxu0 0.0
    %1641 = vmatpush1.msra.mxu0 %v1534
    %1642 = vmatprep.subr.mxu0 0.0
    %1643 = vmatpush1.msra.mxu0 %v1537
    %1644 = vmatprep.subr.mxu0 0.0
    %1645 = vmatpush1.msra.mxu0 %v1540
    %1646 = vmatprep.subr.mxu0 0.0
    %1647 = vmatpush1.msra.mxu0 %v1543
    %1648 = vmatprep.subr.mxu0 0.0
    %1649 = vmatpush1.msra.mxu0 %v1546
    %1650 = vmatprep.subr.mxu0 0.0
    %1651 = vmatpush1.msra.mxu0 0.0
    %1652 = vmatprep.subr.mxu0 0.0
    %1653 = vmatpush1.msra.mxu0 0.0
    %1654 = vmatprep.subr.mxu0 0.0
    %1655 = vmatpush1.msra.mxu0 0.0
    %1656 = vmatprep.subr.mxu0 0.0
    %1657 = vmatpush1.msra.mxu0 0.0
    %1658 = vmatprep.subr.mxu0 0.0
    %1659 = vmatpush1.msra.mxu0 0.0
    %1660 = vmatprep.subr.mxu0 0.0
    %1661 = vmatpush1.msra.mxu0 0.0
    %1662 = vmatprep.subr.mxu0 0.0
    %1663 = vmatpush1.msra.mxu0 0.0
    %1664 = vmatprep.subr.mxu0 0.0
    %1665 = vmatpush1.msra.mxu0 0.0
    %1666 = vmatprep.subr.mxu0 0.0
    %1667 = vmatpush1.msra.mxu0 0.0
    %1668 = vmatprep.subr.mxu0 0.0
    %1669 = vmatpush1.msra.mxu0 0.0
    %1670 = vmatprep.subr.mxu0 0.0
    %1671 = vmatpush1.msra.mxu0 0.0
    %1672 = vmatprep.subr.mxu0 0.0
    %1673 = vmatpush1.msra.mxu0 0.0
    %1674 = vmatprep.subr.mxu0 0.0
    %1675 = vmatpush1.msra.mxu0 0.0
    %1676 = vmatprep.subr.mxu0 0.0
    %1677 = vmatpush1.msra.mxu0 0.0
    %1678 = vmatprep.subr.mxu0 0.0
    %1679 = vmatpush1.msra.mxu0 0.0
    %1680 = vmatprep.subr.mxu0 0.0
    %1681 = vmatpush1.msra.mxu0 0.0
    %1682 = vmatprep.mubr.f32.mxu0 0.0
    %1683 = vmatmul.mubr.f32.gmra.mrb[0].mxu0 %v1492
    %v1684 = vpop.f32.mrb[0].mxu0
    %v1685 = vadd.f32 0.0, %v1684
    %v1686 = vpop.f32.mrb[0].mxu0
    %1687 = vdwg.mxu0
    %v1688 = vadd.f32 %v1496, %v1614
    %v1689 = vxor.u32 %v1688, 2147483648
    %v1690 = vmul.f32 %v1689, 1.442695
    %v1691 = vpow.pop %v1690
    %v1692 = vadd.f32 %v1691, 1.0
    %v1693 = vrcp.pop %v1692
    %v1694 = vmul.f32 1.0, %v1693
    %v1695 = vadd.f32 %v1497, %v1616
    %v1696 = vxor.u32 %v1695, 2147483648
    %v1697 = vmul.f32 %v1696, 1.442695
    %v1698 = vpow.pop %v1697
    %v1699 = vadd.f32 %v1698, 1.0
    %v1700 = vrcp.pop %v1699
    %v1701 = vmul.f32 1.0, %v1700
    %v1702 = vld [vmem:[%s4] sm:$0x1]
    %v1704 = vlaneseq
    %v1705 = vshrl.u32 %v1704, 7
    %v1706 = vsub.s32 0, %v1705
    %v1707 = vrot.slane %v1702, %v1706
    %v1709 = vadd.f32 %v1685, %v1707
    %v1710 = vmul.f32 %v1694, %v1709
    %v1711 = vadd.f32 %v1498, %v1710
    %v1712 = vtanh.pop %v1711
    %v1713 = vsub.f32 1.0, %v1701
    %v1714 = vmul.f32 %v1713, %v1712
    %v1715 = vmul.f32 %v1701, %v1492
    %v1716 = vadd.f32 %v1714, %v1715
    %s1717 = scalar_lea.vmem [#allocation9], 40
    %1718 = vst [vmem:[%s1717] sm:$0xff] %v1716
    %s1719 = scalar_lea.vmem [#allocation2], 144
    %v1720 = vld [vmem:[%s1719] sm:$0xff]
    %v1721 = vld [vmem:[%s1719 + $0x8] sm:$0xff]
    %v1722 = vld [vmem:[%s1719 + $0x10] sm:$0xff]
    %v1723 = vld [vmem:[#allocation8] sm:$0xff]
    %v1724 = vld [vmem:[#allocation8 + $0x8] sm:$0xff]
    %v1725 = vld [vmem:[#allocation8 + $0x10] sm:$0xff]
    %v1726 = vld [vmem:[#allocation8 + $0x18] sm:$0xff]
    %v1727 = vld [vmem:[#allocation8 + $0x20] sm:$0xff]
    %v1728 = vld [vmem:[#allocation8 + $0x28] sm:$0xff]
    %v1729 = vld [vmem:[#allocation8 + $0x30] sm:$0xff]
    %v1730 = vld [vmem:[#allocation8 + $0x38] sm:$0xff]
    %v1731 = vld [vmem:[#allocation8 + $0x40] sm:$0xff]
    %v1732 = vld [vmem:[#allocation8 + $0x48] sm:$0xff]
    %v1733 = vld [vmem:[#allocation8 + $0x50] sm:$0xff]
    %v1734 = vld [vmem:[#allocation8 + $0x58] sm:$0xff]
    %v1735 = vld [vmem:[#allocation8 + $0x60] sm:$0xff]
    %v1736 = vld [vmem:[#allocation8 + $0x68] sm:$0xff]
    %v1737 = vld [vmem:[#allocation8 + $0x70] sm:$0xff]
    %v1738 = vld [vmem:[#allocation8 + $0x78] sm:$0xff]
    %v1739 = vld [vmem:[#allocation8 + $0x80] sm:$0xff]
    %v1740 = vld [vmem:[#allocation8 + $0x88] sm:$0xff]
    %v1741 = vld [vmem:[#allocation8 + $0x90] sm:$0xff]
    %v1742 = vld [vmem:[#allocation8 + $0x98] sm:$0xff]
    %v1743 = vld [vmem:[#allocation8 + $0xa0] sm:$0xff]
    %v1744 = vld [vmem:[#allocation8 + $0xa8] sm:$0xff]
    %v1745 = vld [vmem:[#allocation8 + $0xb0] sm:$0xff]
    %v1746 = vld [vmem:[#allocation8 + $0xb8] sm:$0xff]
    %v1747 = vld [vmem:[#allocation8 + $0xc0] sm:$0xff]
    %v1748 = vld [vmem:[#allocation8 + $0xc8] sm:$0xff]
    %v1749 = vld [vmem:[#allocation8 + $0xd0] sm:$0xff]
    %v1750 = vld [vmem:[#allocation8 + $0xd8] sm:$0xff]
    %v1751 = vld [vmem:[#allocation8 + $0xe0] sm:$0xff]
    %v1752 = vld [vmem:[#allocation8 + $0xe8] sm:$0xff]
    %v1753 = vld [vmem:[#allocation8 + $0xf0] sm:$0xff]
    %v1754 = vld [vmem:[#allocation8 + $0xf8] sm:$0xff]
    %v1755 = vld [vmem:[#allocation8 + $0x100] sm:$0xff]
    %v1756 = vld [vmem:[#allocation8 + $0x108] sm:$0xff]
    %v1757 = vld [vmem:[#allocation8 + $0x110] sm:$0xff]
    %v1758 = vld [vmem:[#allocation8 + $0x118] sm:$0xff]
    %v1759 = vld [vmem:[#allocation8 + $0x120] sm:$0xff]
    %v1760 = vld [vmem:[#allocation8 + $0x128] sm:$0xff]
    %v1761 = vld [vmem:[#allocation8 + $0x130] sm:$0xff]
    %v1762 = vld [vmem:[#allocation8 + $0x138] sm:$0xff]
    %v1763 = vld [vmem:[#allocation8 + $0x140] sm:$0xff]
    %v1764 = vld [vmem:[#allocation8 + $0x148] sm:$0xff]
    %v1765 = vld [vmem:[#allocation8 + $0x150] sm:$0xff]
    %v1766 = vld [vmem:[#allocation8 + $0x158] sm:$0xff]
    %v1767 = vld [vmem:[#allocation8 + $0x160] sm:$0xff]
    %v1768 = vld [vmem:[#allocation8 + $0x168] sm:$0xff]
    %v1769 = vld [vmem:[#allocation8 + $0x170] sm:$0xff]
    %v1770 = vld [vmem:[#allocation8 + $0x178] sm:$0xff]
    %1771 = vmatprep.subr.mxu0 %v1724
    %1772 = vmatpush1.msra.mxu0 %v1723
    %1773 = vmatprep.subr.mxu0 %v1727
    %1774 = vmatpush1.msra.mxu0 %v1726
    %1775 = vmatprep.subr.mxu0 %v1730
    %1776 = vmatpush1.msra.mxu0 %v1729
    %1777 = vmatprep.subr.mxu0 %v1733
    %1778 = vmatpush1.msra.mxu0 %v1732
    %1779 = vmatprep.subr.mxu0 %v1736
    %1780 = vmatpush1.msra.mxu0 %v1735
    %1781 = vmatprep.subr.mxu0 %v1739
    %1782 = vmatpush1.msra.mxu0 %v1738
    %1783 = vmatprep.subr.mxu0 %v1742
    %1784 = vmatpush1.msra.mxu0 %v1741
    %1785 = vmatprep.subr.mxu0 %v1745
    %1786 = vmatpush1.msra.mxu0 %v1744
    %1787 = vmatprep.subr.mxu0 %v1748
    %1788 = vmatpush1.msra.mxu0 %v1747
    %1789 = vmatprep.subr.mxu0 %v1751
    %1790 = vmatpush1.msra.mxu0 %v1750
    %1791 = vmatprep.subr.mxu0 %v1754
    %1792 = vmatpush1.msra.mxu0 %v1753
    %1793 = vmatprep.subr.mxu0 %v1757
    %1794 = vmatpush1.msra.mxu0 %v1756
    %1795 = vmatprep.subr.mxu0 %v1760
    %1796 = vmatpush1.msra.mxu0 %v1759
    %1797 = vmatprep.subr.mxu0 %v1763
    %1798 = vmatpush1.msra.mxu0 %v1762
    %1799 = vmatprep.subr.mxu0 %v1766
    %1800 = vmatpush1.msra.mxu0 %v1765
    %1801 = vmatprep.subr.mxu0 %v1769
    %1802 = vmatpush1.msra.mxu0 %v1768
    %1803 = vmatprep.subr.mxu0 0.0
    %1804 = vmatpush1.msra.mxu0 0.0
    %1805 = vmatprep.subr.mxu0 0.0
    %1806 = vmatpush1.msra.mxu0 0.0
    %1807 = vmatprep.subr.mxu0 0.0
    %1808 = vmatpush1.msra.mxu0 0.0
    %1809 = vmatprep.subr.mxu0 0.0
    %1810 = vmatpush1.msra.mxu0 0.0
    %1811 = vmatprep.subr.mxu0 0.0
    %1812 = vmatpush1.msra.mxu0 0.0
    %1813 = vmatprep.subr.mxu0 0.0
    %1814 = vmatpush1.msra.mxu0 0.0
    %1815 = vmatprep.subr.mxu0 0.0
    %1816 = vmatpush1.msra.mxu0 0.0
    %1817 = vmatprep.subr.mxu0 0.0
    %1818 = vmatpush1.msra.mxu0 0.0
    %1819 = vmatprep.subr.mxu0 0.0
    %1820 = vmatpush1.msra.mxu0 0.0
    %1821 = vmatprep.subr.mxu0 0.0
    %1822 = vmatpush1.msra.mxu0 0.0
    %1823 = vmatprep.subr.mxu0 0.0
    %1824 = vmatpush1.msra.mxu0 0.0
    %1825 = vmatprep.subr.mxu0 0.0
    %1826 = vmatpush1.msra.mxu0 0.0
    %1827 = vmatprep.subr.mxu0 0.0
    %1828 = vmatpush1.msra.mxu0 0.0
    %1829 = vmatprep.subr.mxu0 0.0
    %1830 = vmatpush1.msra.mxu0 0.0
    %1831 = vmatprep.subr.mxu0 0.0
    %1832 = vmatpush1.msra.mxu0 0.0
    %1833 = vmatprep.subr.mxu0 0.0
    %1834 = vmatpush1.msra.mxu0 0.0
    %1835 = vmatprep.mubr.f32.mxu0 0.0
    %1836 = vmatmul.mubr.f32.gmra.mrb[0].mxu0 %v1716
    %v1837 = vpop.f32.mrb[0].mxu0
    %v1838 = vadd.f32 0.0, %v1837
    %v1839 = vpop.f32.mrb[0].mxu0
    %v1840 = vadd.f32 0.0, %v1839
    %1841 = vdwg.mxu0
    %1842 = vmatprep.subr.mxu0 0.0
    %1843 = vmatpush1.msra.mxu0 %v1725
    %1844 = vmatprep.subr.mxu0 0.0
    %1845 = vmatpush1.msra.mxu0 %v1728
    %1846 = vmatprep.subr.mxu0 0.0
    %1847 = vmatpush1.msra.mxu0 %v1731
    %1848 = vmatprep.subr.mxu0 0.0
    %1849 = vmatpush1.msra.mxu0 %v1734
    %1850 = vmatprep.subr.mxu0 0.0
    %1851 = vmatpush1.msra.mxu0 %v1737
    %1852 = vmatprep.subr.mxu0 0.0
    %1853 = vmatpush1.msra.mxu0 %v1740
    %1854 = vmatprep.subr.mxu0 0.0
    %1855 = vmatpush1.msra.mxu0 %v1743
    %1856 = vmatprep.subr.mxu0 0.0
    %1857 = vmatpush1.msra.mxu0 %v1746
    %1858 = vmatprep.subr.mxu0 0.0
    %1859 = vmatpush1.msra.mxu0 %v1749
    %1860 = vmatprep.subr.mxu0 0.0
    %1861 = vmatpush1.msra.mxu0 %v1752
    %1862 = vmatprep.subr.mxu0 0.0
    %1863 = vmatpush1.msra.mxu0 %v1755
    %1864 = vmatprep.subr.mxu0 0.0
    %1865 = vmatpush1.msra.mxu0 %v1758
    %1866 = vmatprep.subr.mxu0 0.0
    %1867 = vmatpush1.msra.mxu0 %v1761
    %1868 = vmatprep.subr.mxu0 0.0
    %1869 = vmatpush1.msra.mxu0 %v1764
    %1870 = vmatprep.subr.mxu0 0.0
    %1871 = vmatpush1.msra.mxu0 %v1767
    %1872 = vmatprep.subr.mxu0 0.0
    %1873 = vmatpush1.msra.mxu0 %v1770
    %1874 = vmatprep.subr.mxu0 0.0
    %1875 = vmatpush1.msra.mxu0 0.0
    %1876 = vmatprep.subr.mxu0 0.0
    %1877 = vmatpush1.msra.mxu0 0.0
    %1878 = vmatprep.subr.mxu0 0.0
    %1879 = vmatpush1.msra.mxu0 0.0
    %1880 = vmatprep.subr.mxu0 0.0
    %1881 = vmatpush1.msra.mxu0 0.0
    %1882 = vmatprep.subr.mxu0 0.0
    %1883 = vmatpush1.msra.mxu0 0.0
    %1884 = vmatprep.subr.mxu0 0.0
    %1885 = vmatpush1.msra.mxu0 0.0
    %1886 = vmatprep.subr.mxu0 0.0
    %1887 = vmatpush1.msra.mxu0 0.0
    %1888 = vmatprep.subr.mxu0 0.0
    %1889 = vmatpush1.msra.mxu0 0.0
    %1890 = vmatprep.subr.mxu0 0.0
    %1891 = vmatpush1.msra.mxu0 0.0
    %1892 = vmatprep.subr.mxu0 0.0
    %1893 = vmatpush1.msra.mxu0 0.0
    %1894 = vmatprep.subr.mxu0 0.0
    %1895 = vmatpush1.msra.mxu0 0.0
    %1896 = vmatprep.subr.mxu0 0.0
    %1897 = vmatpush1.msra.mxu0 0.0
    %1898 = vmatprep.subr.mxu0 0.0
    %1899 = vmatpush1.msra.mxu0 0.0
    %1900 = vmatprep.subr.mxu0 0.0
    %1901 = vmatpush1.msra.mxu0 0.0
    %1902 = vmatprep.subr.mxu0 0.0
    %1903 = vmatpush1.msra.mxu0 0.0
    %1904 = vmatprep.subr.mxu0 0.0
    %1905 = vmatpush1.msra.mxu0 0.0
    %1906 = vmatprep.mubr.f32.mxu0 0.0
    %1907 = vmatmul.mubr.f32.gmra.mrb[0].mxu0 %v1716
    %v1908 = vpop.f32.mrb[0].mxu0
    %v1909 = vadd.f32 0.0, %v1908
    %v1910 = vpop.f32.mrb[0].mxu0
    %1911 = vdwg.mxu0
    %v1912 = vadd.f32 %v1720, %v1838
    %v1913 = vxor.u32 %v1912, 2147483648
    %v1914 = vmul.f32 %v1913, 1.442695
    %v1915 = vpow.pop %v1914
    %v1916 = vadd.f32 %v1915, 1.0
    %v1917 = vrcp.pop %v1916
    %v1918 = vmul.f32 1.0, %v1917
    %v1919 = vadd.f32 %v1721, %v1840
    %v1920 = vxor.u32 %v1919, 2147483648
    %v1921 = vmul.f32 %v1920, 1.442695
    %v1922 = vpow.pop %v1921
    %v1923 = vadd.f32 %v1922, 1.0
    %v1924 = vrcp.pop %v1923
    %v1925 = vmul.f32 1.0, %v1924
    %v1926 = vld [vmem:[%s4] sm:$0x1]
    %v1928 = vlaneseq
    %v1929 = vshrl.u32 %v1928, 7
    %v1930 = vsub.s32 0, %v1929
    %v1931 = vrot.slane %v1926, %v1930
    %v1933 = vadd.f32 %v1909, %v1931
    %v1934 = vmul.f32 %v1918, %v1933
    %v1935 = vadd.f32 %v1722, %v1934
    %v1936 = vtanh.pop %v1935
    %v1937 = vsub.f32 1.0, %v1925
    %v1938 = vmul.f32 %v1937, %v1936
    %v1939 = vmul.f32 %v1925, %v1716
    %v1940 = vadd.f32 %v1938, %v1939
    %s1941 = scalar_lea.vmem [#allocation9], 48
    %1942 = vst [vmem:[%s1941] sm:$0xff] %v1940
    %s1943 = scalar_lea.vmem [#allocation2], 168
    %v1944 = vld [vmem:[%s1943] sm:$0xff]
    %v1945 = vld [vmem:[%s1943 + $0x8] sm:$0xff]
    %v1946 = vld [vmem:[%s1943 + $0x10] sm:$0xff]
    %v1947 = vld [vmem:[#allocation8] sm:$0xff]
    %v1948 = vld [vmem:[#allocation8 + $0x8] sm:$0xff]
    %v1949 = vld [vmem:[#allocation8 + $0x10] sm:$0xff]
    %v1950 = vld [vmem:[#allocation8 + $0x18] sm:$0xff]
    %v1951 = vld [vmem:[#allocation8 + $0x20] sm:$0xff]
    %v1952 = vld [vmem:[#allocation8 + $0x28] sm:$0xff]
    %v1953 = vld [vmem:[#allocation8 + $0x30] sm:$0xff]
    %v1954 = vld [vmem:[#allocation8 + $0x38] sm:$0xff]
    %v1955 = vld [vmem:[#allocation8 + $0x40] sm:$0xff]
    %v1956 = vld [vmem:[#allocation8 + $0x48] sm:$0xff]
    %v1957 = vld [vmem:[#allocation8 + $0x50] sm:$0xff]
    %v1958 = vld [vmem:[#allocation8 + $0x58] sm:$0xff]
    %v1959 = vld [vmem:[#allocation8 + $0x60] sm:$0xff]
    %v1960 = vld [vmem:[#allocation8 + $0x68] sm:$0xff]
    %v1961 = vld [vmem:[#allocation8 + $0x70] sm:$0xff]
    %v1962 = vld [vmem:[#allocation8 + $0x78] sm:$0xff]
    %v1963 = vld [vmem:[#allocation8 + $0x80] sm:$0xff]
    %v1964 = vld [vmem:[#allocation8 + $0x88] sm:$0xff]
    %v1965 = vld [vmem:[#allocation8 + $0x90] sm:$0xff]
    %v1966 = vld [vmem:[#allocation8 + $0x98] sm:$0xff]
    %v1967 = vld [vmem:[#allocation8 + $0xa0] sm:$0xff]
    %v1968 = vld [vmem:[#allocation8 + $0xa8] sm:$0xff]
    %v1969 = vld [vmem:[#allocation8 + $0xb0] sm:$0xff]
    %v1970 = vld [vmem:[#allocation8 + $0xb8] sm:$0xff]
    %v1971 = vld [vmem:[#allocation8 + $0xc0] sm:$0xff]
    %v1972 = vld [vmem:[#allocation8 + $0xc8] sm:$0xff]
    %v1973 = vld [vmem:[#allocation8 + $0xd0] sm:$0xff]
    %v1974 = vld [vmem:[#allocation8 + $0xd8] sm:$0xff]
    %v1975 = vld [vmem:[#allocation8 + $0xe0] sm:$0xff]
    %v1976 = vld [vmem:[#allocation8 + $0xe8] sm:$0xff]
    %v1977 = vld [vmem:[#allocation8 + $0xf0] sm:$0xff]
    %v1978 = vld [vmem:[#allocation8 + $0xf8] sm:$0xff]
    %v1979 = vld [vmem:[#allocation8 + $0x100] sm:$0xff]
    %v1980 = vld [vmem:[#allocation8 + $0x108] sm:$0xff]
    %v1981 = vld [vmem:[#allocation8 + $0x110] sm:$0xff]
    %v1982 = vld [vmem:[#allocation8 + $0x118] sm:$0xff]
    %v1983 = vld [vmem:[#allocation8 + $0x120] sm:$0xff]
    %v1984 = vld [vmem:[#allocation8 + $0x128] sm:$0xff]
    %v1985 = vld [vmem:[#allocation8 + $0x130] sm:$0xff]
    %v1986 = vld [vmem:[#allocation8 + $0x138] sm:$0xff]
    %v1987 = vld [vmem:[#allocation8 + $0x140] sm:$0xff]
    %v1988 = vld [vmem:[#allocation8 + $0x148] sm:$0xff]
    %v1989 = vld [vmem:[#allocation8 + $0x150] sm:$0xff]
    %v1990 = vld [vmem:[#allocation8 + $0x158] sm:$0xff]
    %v1991 = vld [vmem:[#allocation8 + $0x160] sm:$0xff]
    %v1992 = vld [vmem:[#allocation8 + $0x168] sm:$0xff]
    %v1993 = vld [vmem:[#allocation8 + $0x170] sm:$0xff]
    %v1994 = vld [vmem:[#allocation8 + $0x178] sm:$0xff]
    %1995 = vmatprep.subr.mxu0 %v1948
    %1996 = vmatpush1.msra.mxu0 %v1947
    %1997 = vmatprep.subr.mxu0 %v1951
    %1998 = vmatpush1.msra.mxu0 %v1950
    %1999 = vmatprep.subr.mxu0 %v1954
    %2000 = vmatpush1.msra.mxu0 %v1953
    %2001 = vmatprep.subr.mxu0 %v1957
    %2002 = vmatpush1.msra.mxu0 %v1956
    %2003 = vmatprep.subr.mxu0 %v1960
    %2004 = vmatpush1.msra.mxu0 %v1959
    %2005 = vmatprep.subr.mxu0 %v1963
    %2006 = vmatpush1.msra.mxu0 %v1962
    %2007 = vmatprep.subr.mxu0 %v1966
    %2008 = vmatpush1.msra.mxu0 %v1965
    %2009 = vmatprep.subr.mxu0 %v1969
    %2010 = vmatpush1.msra.mxu0 %v1968
    %2011 = vmatprep.subr.mxu0 %v1972
    %2012 = vmatpush1.msra.mxu0 %v1971
    %2013 = vmatprep.subr.mxu0 %v1975
    %2014 = vmatpush1.msra.mxu0 %v1974
    %2015 = vmatprep.subr.mxu0 %v1978
    %2016 = vmatpush1.msra.mxu0 %v1977
    %2017 = vmatprep.subr.mxu0 %v1981
    %2018 = vmatpush1.msra.mxu0 %v1980
    %2019 = vmatprep.subr.mxu0 %v1984
    %2020 = vmatpush1.msra.mxu0 %v1983
    %2021 = vmatprep.subr.mxu0 %v1987
    %2022 = vmatpush1.msra.mxu0 %v1986
    %2023 = vmatprep.subr.mxu0 %v1990
    %2024 = vmatpush1.msra.mxu0 %v1989
    %2025 = vmatprep.subr.mxu0 %v1993
    %2026 = vmatpush1.msra.mxu0 %v1992
    %2027 = vmatprep.subr.mxu0 0.0
    %2028 = vmatpush1.msra.mxu0 0.0
    %2029 = vmatprep.subr.mxu0 0.0
    %2030 = vmatpush1.msra.mxu0 0.0
    %2031 = vmatprep.subr.mxu0 0.0
    %2032 = vmatpush1.msra.mxu0 0.0
    %2033 = vmatprep.subr.mxu0 0.0
    %2034 = vmatpush1.msra.mxu0 0.0
    %2035 = vmatprep.subr.mxu0 0.0
    %2036 = vmatpush1.msra.mxu0 0.0
    %2037 = vmatprep.subr.mxu0 0.0
    %2038 = vmatpush1.msra.mxu0 0.0
    %2039 = vmatprep.subr.mxu0 0.0
    %2040 = vmatpush1.msra.mxu0 0.0
    %2041 = vmatprep.subr.mxu0 0.0
    %2042 = vmatpush1.msra.mxu0 0.0
    %2043 = vmatprep.subr.mxu0 0.0
    %2044 = vmatpush1.msra.mxu0 0.0
    %2045 = vmatprep.subr.mxu0 0.0
    %2046 = vmatpush1.msra.mxu0 0.0
    %2047 = vmatprep.subr.mxu0 0.0
    %2048 = vmatpush1.msra.mxu0 0.0
    %2049 = vmatprep.subr.mxu0 0.0
    %2050 = vmatpush1.msra.mxu0 0.0
    %2051 = vmatprep.subr.mxu0 0.0
    %2052 = vmatpush1.msra.mxu0 0.0
    %2053 = vmatprep.subr.mxu0 0.0
    %2054 = vmatpush1.msra.mxu0 0.0
    %2055 = vmatprep.subr.mxu0 0.0
    %2056 = vmatpush1.msra.mxu0 0.0
    %2057 = vmatprep.subr.mxu0 0.0
    %2058 = vmatpush1.msra.mxu0 0.0
    %2059 = vmatprep.mubr.f32.mxu0 0.0
    %2060 = vmatmul.mubr.f32.gmra.mrb[0].mxu0 %v1940
    %v2061 = vpop.f32.mrb[0].mxu0
    %v2062 = vadd.f32 0.0, %v2061
    %v2063 = vpop.f32.mrb[0].mxu0
    %v2064 = vadd.f32 0.0, %v2063
    %2065 = vdwg.mxu0
    %2066 = vmatprep.subr.mxu0 0.0
    %2067 = vmatpush1.msra.mxu0 %v1949
    %2068 = vmatprep.subr.mxu0 0.0
    %2069 = vmatpush1.msra.mxu0 %v1952
    %2070 = vmatprep.subr.mxu0 0.0
    %2071 = vmatpush1.msra.mxu0 %v1955
    %2072 = vmatprep.subr.mxu0 0.0
    %2073 = vmatpush1.msra.mxu0 %v1958
    %2074 = vmatprep.subr.mxu0 0.0
    %2075 = vmatpush1.msra.mxu0 %v1961
    %2076 = vmatprep.subr.mxu0 0.0
    %2077 = vmatpush1.msra.mxu0 %v1964
    %2078 = vmatprep.subr.mxu0 0.0
    %2079 = vmatpush1.msra.mxu0 %v1967
    %2080 = vmatprep.subr.mxu0 0.0
    %2081 = vmatpush1.msra.mxu0 %v1970
    %2082 = vmatprep.subr.mxu0 0.0
    %2083 = vmatpush1.msra.mxu0 %v1973
    %2084 = vmatprep.subr.mxu0 0.0
    %2085 = vmatpush1.msra.mxu0 %v1976
    %2086 = vmatprep.subr.mxu0 0.0
    %2087 = vmatpush1.msra.mxu0 %v1979
    %2088 = vmatprep.subr.mxu0 0.0
    %2089 = vmatpush1.msra.mxu0 %v1982
    %2090 = vmatprep.subr.mxu0 0.0
    %2091 = vmatpush1.msra.mxu0 %v1985
    %2092 = vmatprep.subr.mxu0 0.0
    %2093 = vmatpush1.msra.mxu0 %v1988
    %2094 = vmatprep.subr.mxu0 0.0
    %2095 = vmatpush1.msra.mxu0 %v1991
    %2096 = vmatprep.subr.mxu0 0.0
    %2097 = vmatpush1.msra.mxu0 %v1994
    %2098 = vmatprep.subr.mxu0 0.0
    %2099 = vmatpush1.msra.mxu0 0.0
    %2100 = vmatprep.subr.mxu0 0.0
    %2101 = vmatpush1.msra.mxu0 0.0
    %2102 = vmatprep.subr.mxu0 0.0
    %2103 = vmatpush1.msra.mxu0 0.0
    %2104 = vmatprep.subr.mxu0 0.0
    %2105 = vmatpush1.msra.mxu0 0.0
    %2106 = vmatprep.subr.mxu0 0.0
    %2107 = vmatpush1.msra.mxu0 0.0
    %2108 = vmatprep.subr.mxu0 0.0
    %2109 = vmatpush1.msra.mxu0 0.0
    %2110 = vmatprep.subr.mxu0 0.0
    %2111 = vmatpush1.msra.mxu0 0.0
    %2112 = vmatprep.subr.mxu0 0.0
    %2113 = vmatpush1.msra.mxu0 0.0
    %2114 = vmatprep.subr.mxu0 0.0
    %2115 = vmatpush1.msra.mxu0 0.0
    %2116 = vmatprep.subr.mxu0 0.0
    %2117 = vmatpush1.msra.mxu0 0.0
    %2118 = vmatprep.subr.mxu0 0.0
    %2119 = vmatpush1.msra.mxu0 0.0
    %2120 = vmatprep.subr.mxu0 0.0
    %2121 = vmatpush1.msra.mxu0 0.0
    %2122 = vmatprep.subr.mxu0 0.0
    %2123 = vmatpush1.msra.mxu0 0.0
    %2124 = vmatprep.subr.mxu0 0.0
    %2125 = vmatpush1.msra.mxu0 0.0
    %2126 = vmatprep.subr.mxu0 0.0
    %2127 = vmatpush1.msra.mxu0 0.0
    %2128 = vmatprep.subr.mxu0 0.0
    %2129 = vmatpush1.msra.mxu0 0.0
    %2130 = vmatprep.mubr.f32.mxu0 0.0
    %2131 = vmatmul.mubr.f32.gmra.mrb[0].mxu0 %v1940
    %v2132 = vpop.f32.mrb[0].mxu0
    %v2133 = vadd.f32 0.0, %v2132
    %v2134 = vpop.f32.mrb[0].mxu0
    %2135 = vdwg.mxu0
    %v2136 = vadd.f32 %v1944, %v2062
    %v2137 = vxor.u32 %v2136, 2147483648
    %v2138 = vmul.f32 %v2137, 1.442695
    %v2139 = vpow.pop %v2138
    %v2140 = vadd.f32 %v2139, 1.0
    %v2141 = vrcp.pop %v2140
    %v2142 = vmul.f32 1.0, %v2141
    %v2143 = vadd.f32 %v1945, %v2064
    %v2144 = vxor.u32 %v2143, 2147483648
    %v2145 = vmul.f32 %v2144, 1.442695
    %v2146 = vpow.pop %v2145
    %v2147 = vadd.f32 %v2146, 1.0
    %v2148 = vrcp.pop %v2147
    %v2149 = vmul.f32 1.0, %v2148
    %v2150 = vld [vmem:[%s4] sm:$0x1]
    %v2152 = vlaneseq
    %v2153 = vshrl.u32 %v2152, 7
    %v2154 = vsub.s32 0, %v2153
    %v2155 = vrot.slane %v2150, %v2154
    %v2157 = vadd.f32 %v2133, %v2155
    %v2158 = vmul.f32 %v2142, %v2157
    %v2159 = vadd.f32 %v1946, %v2158
    %v2160 = vtanh.pop %v2159
    %v2161 = vsub.f32 1.0, %v2149
    %v2162 = vmul.f32 %v2161, %v2160
    %v2163 = vmul.f32 %v2149, %v1940
    %v2164 = vadd.f32 %v2162, %v2163
    %s2165 = scalar_lea.vmem [#allocation9], 56
    %2166 = vst [vmem:[%s2165] sm:$0xff] %v2164
    // Predicated region
    $region34: #{tpu_custom_call.1} parent=1 // pred_check
      _
    $region35: #{tpu_custom_call.1} parent=1 // pred_check_branch
      %2168 = sbr.rel (0) target = $region37
    $region36: #{tpu_custom_call.1} parent=1 // pred_region
      %s2170 = ssub.s32 1024, 1024
      %2171 = vsyncadd [#allocation5], %s2170
      %s2172 = sshll.u32 [#allocation9], 4
      %s2173 = int_to_ptr.vmem [resolvable:$true] %s2172
      %2178 = dma.vmem_to_hbm [thread:$0]  %s2173, 1024, %s5, [#allocation5], 128, 128, 8
    $region37: #{tpu_custom_call.1} parent=1 // pred_fallthru
      _
    // Predicated region
    $region38: #{tpu_custom_call.1} parent=1 // pred_check
      _
    $region39: #{tpu_custom_call.1} parent=1 // pred_check_branch
      %2180 = sbr.rel (0) target = $region41
    $region40: #{tpu_custom_call.1} parent=1 // pred_region
      %2181 = dma.done [#allocation5], 1024
    $region41: #{tpu_custom_call.1} parent=1 // pred_fallthru
      _
    %2182 = vsyncpa [#allocation4], 1
    %2183 = vsyncpa [#allocation7], 1
    %2184 = vsyncpa [#allocation5], 1

</llo_original>
